<compile_context>
chip_gen: v7x
topology: tpu7x:2x2x1
jax: 0.10.0
libtpu: 0.0.40
codegen_flags: <defaults>
</compile_context>

<pallas_src>
import functools
import math

import jax
import jax.numpy as jnp
from jax.experimental import pallas as pl
from jax.experimental.pallas import tpu as pltpu

# ---- small config consistent with the module ----
BATCH = 2
N_CTX = 8                         # query sequence length
N_DATA = 16                       # key/value sequence length
HEADS = 4
KV_WIDTH = 64                     # kv width (heads * 2 * attn_ch)
ATTN_CH = KV_WIDTH // HEADS // 2  # 8, as in the module
Q_WIDTH = HEADS * ATTN_CH         # 32


def _cross_attn_kernel(q_ref, kv_ref, o_ref, *, heads, attn_ch, scale):
    """Fused multi-head cross attention, one invocation, natural layouts.

    q_ref:  (bs, n_ctx,  heads*attn_ch)   VMEM
    kv_ref: (bs, n_data, heads*2*attn_ch) VMEM  (per-head [K|V] interleave)
    o_ref:  (bs, n_ctx,  heads*attn_ch)   VMEM  (head-major, final layout)
    """
    q = q_ref[...]
    kv = kv_ref[...]
    scale2 = scale * scale  # folded: (q*scale)·(k*scale) == (q·k) * scale^2

    # Static Python loop over heads (trace-time unroll; heads is tiny).
    for h in range(heads):
        q_h = q[:, :, h * attn_ch:(h + 1) * attn_ch]                 # (bs, T, C)
        k_h = kv[:, :, h * 2 * attn_ch: h * 2 * attn_ch + attn_ch]   # (bs, S, C)
        v_h = kv[:, :, h * 2 * attn_ch + attn_ch: (h + 1) * 2 * attn_ch]

        # scores: (bs, T, S) — batched matmul on the MXU, no explicit k.T
        s = jnp.einsum('btc,bsc->bts', q_h, k_h,
                       preferred_element_type=jnp.float32) * scale2
        # softmax in float32 (matches torch.softmax(weight.float(), dim=-1))
        s = s - jnp.max(s, axis=-1, keepdims=True)
        p = jnp.exp(s)
        p = p * pl.reciprocal(jnp.sum(p, axis=-1, keepdims=True))
        p = p.astype(v_h.dtype)                                       # .type(wdtype)

        # out_h: (bs, T, C), stored straight into its head-major lane slot.
        o_h = jnp.einsum('bts,bsc->btc', p, v_h,
                         preferred_element_type=jnp.float32)
        o_ref[:, :, h * attn_ch:(h + 1) * attn_ch] = o_h.astype(o_ref.dtype)


def qkv_multihead_cross_attention(q, kv, heads=HEADS):
    """q: (bs, n_ctx, heads*attn_ch) ; kv: (bs, n_data, heads*2*attn_ch)."""
    bs, n_ctx, q_width = q.shape
    _, n_data, width = kv.shape
    attn_ch = width // heads // 2
    assert q_width == heads * attn_ch
    scale = 1.0 / math.sqrt(math.sqrt(attn_ch))

    kernel = functools.partial(
        _cross_attn_kernel, heads=heads, attn_ch=attn_ch, scale=scale)

    itemsize = jnp.dtype(q.dtype).itemsize
    cost = pl.CostEstimate(
        flops=4 * bs * heads * n_ctx * n_data * attn_ch,   # two matmuls
        transcendentals=bs * heads * n_ctx * n_data,        # softmax exp
        bytes_accessed=(q.size + kv.size + bs * n_ctx * q_width) * itemsize,
    )

    return pl.pallas_call(
        kernel,
        out_shape=jax.ShapeDtypeStruct((bs, n_ctx, q_width), q.dtype),
        grid=(1,),  # single step: whole working set fits VMEM with huge margin
        in_specs=[
            pl.BlockSpec((bs, n_ctx, q_width), lambda i: (0, 0, 0)),
            pl.BlockSpec((bs, n_data, width), lambda i: (0, 0, 0)),
        ],
        out_specs=pl.BlockSpec((bs, n_ctx, q_width), lambda i: (0, 0, 0)),
        compiler_params=pltpu.CompilerParams(dimension_semantics=("arbitrary",)),
        cost_estimate=cost,
    )(q, kv)


def _reference(q, kv, heads=HEADS):
    """Pure-JAX mirror of the PyTorch non-flash forward."""
    bs, n_ctx, _ = q.shape
    _, n_data, width = kv.shape
    attn_ch = width // heads // 2
    scale = 1.0 / math.sqrt(math.sqrt(attn_ch))
    qh = q.reshape(bs, n_ctx, heads, -1)
    kvh = kv.reshape(bs, n_data, heads, -1)
    k = kvh[..., :attn_ch]
    v = kvh[..., attn_ch:]
    w = jnp.einsum('bthc,bshc->bhts', qh * scale, k * scale)
    w = jax.nn.softmax(w.astype(jnp.float32), axis=-1)
    out = jnp.einsum('bhts,bshc->bthc', w, v).reshape(bs, n_ctx, -1)
    return out


if __name__ == "__main__":
    key = jax.random.PRNGKey(0)
    k_q, k_kv = jax.random.split(key, 2)

    q = jax.random.normal(k_q, (BATCH, N_CTX, Q_WIDTH), dtype=jnp.float32)
    kv = jax.random.normal(k_kv, (BATCH, N_DATA, KV_WIDTH), dtype=jnp.float32)

    out = qkv_multihead_cross_attention(q, kv, HEADS)
    out = jax.block_until_ready(out)

    ref = _reference(q, kv, HEADS)
    assert out.shape == (BATCH, N_CTX, Q_WIDTH)
    assert jnp.allclose(out, ref, atol=2e-5, rtol=2e-5), "mismatch vs reference"

    print("KERNEL_OK")
</pallas_src>

<mosaic_0001>
module attributes {stable_mosaic.version = 11 : i64} {
  func.func @_cross_attn_kernel(%arg0: i32, %arg1: memref<2x8x32xf32, #tpu.memory_space<vmem>>, %arg2: memref<2x16x64xf32, #tpu.memory_space<vmem>>, %arg3: memref<2x8x32xf32, #tpu.memory_space<vmem>>) attributes {dimension_semantics = [#tpu.dimension_semantics<arbitrary>], iteration_bounds = array<i64: 1>, scalar_prefetch = 0 : i64, scratch_operands = 0 : i64, tpu.core_type = #tpu.core_type<tc>, window_params = [{pipeline_mode = #tpu.pipeline_mode<synchronous>, transform_indices = @transform_0, window_bounds = array<i64: 2, 8, 32>}, {pipeline_mode = #tpu.pipeline_mode<synchronous>, transform_indices = @transform_1, window_bounds = array<i64: 2, 16, 64>}, {pipeline_mode = #tpu.pipeline_mode<synchronous>, transform_indices = @transform_2, window_bounds = array<i64: 2, 8, 32>}]} {
    %c0 = arith.constant 0 : index
    %c0_0 = arith.constant 0 : index
    %c0_1 = arith.constant 0 : index
    %0 = vector.load %arg1[%c0, %c0_0, %c0_1] : memref<2x8x32xf32, #tpu.memory_space<vmem>>, vector<2x8x32xf32>
    %c0_2 = arith.constant 0 : index
    %c0_3 = arith.constant 0 : index
    %c0_4 = arith.constant 0 : index
    %1 = vector.load %arg2[%c0_2, %c0_3, %c0_4] : memref<2x16x64xf32, #tpu.memory_space<vmem>>, vector<2x16x64xf32>
    %2 = vector.extract_strided_slice %0 {offsets = [0, 0, 0], sizes = [2, 8, 8], strides = [1, 1, 1]} : vector<2x8x32xf32> to vector<2x8x8xf32>
    %3 = vector.extract_strided_slice %1 {offsets = [0, 0, 0], sizes = [2, 16, 8], strides = [1, 1, 1]} : vector<2x16x64xf32> to vector<2x16x8xf32>
    %4 = vector.extract_strided_slice %1 {offsets = [0, 0, 8], sizes = [2, 16, 8], strides = [1, 1, 1]} : vector<2x16x64xf32> to vector<2x16x8xf32>
    "tpu.trace_start"() <{level = 10 : i32, message = "btc,bsc->bts"}> : () -> ()
    %cst = arith.constant dense<0.000000e+00> : vector<2x8x16xf32>
    %5 = tpu.matmul %2, %3, %cst {dimension_numbers = #tpu.dot_dimension_numbers<[2], [2], [1], [1], [0, 0, 0, 1, 1, 1], [0], [0]>} : vector<2x8x8xf32>, vector<2x16x8xf32>, vector<2x8x16xf32> -> vector<2x8x16xf32>
    "tpu.trace_stop"() : () -> ()
    %cst_5 = arith.constant 0.353553385 : f32
    %6 = vector.broadcast %cst_5 : f32 to vector<2x8x16xf32>
    %7 = arith.mulf %5, %6 : vector<2x8x16xf32>
    %cst_6 = arith.constant dense<0xFF800000> : vector<2x8xf32>
    %8 = vector.multi_reduction <maximumf>, %7, %cst_6 [2] : vector<2x8x16xf32> to vector<2x8xf32>
    %9 = vector.shape_cast %8 : vector<2x8xf32> to vector<2x8x1xf32>
    %10 = vector.broadcast %9 : vector<2x8x1xf32> to vector<2x8x16xf32>
    %11 = arith.subf %7, %10 : vector<2x8x16xf32>
    %12 = math.exp %11 : vector<2x8x16xf32>
    %cst_7 = arith.constant dense<0.000000e+00> : vector<2x8xf32>
    %13 = vector.multi_reduction <add>, %12, %cst_7 [2] : vector<2x8x16xf32> to vector<2x8xf32>
    %14 = vector.shape_cast %13 : vector<2x8xf32> to vector<2x8x1xf32>
    %15 = tpu.reciprocal %14 : vector<2x8x1xf32> -> vector<2x8x1xf32>
    %16 = vector.broadcast %15 : vector<2x8x1xf32> to vector<2x8x16xf32>
    %17 = arith.mulf %12, %16 : vector<2x8x16xf32>
    "tpu.trace_start"() <{level = 10 : i32, message = "bts,bsc->btc"}> : () -> ()
    %cst_8 = arith.constant dense<0.000000e+00> : vector<2x8x8xf32>
    %18 = tpu.matmul %17, %4, %cst_8 {dimension_numbers = #tpu.dot_dimension_numbers<[2], [1], [1], [2], [0, 0, 0, 1, 1, 2], [0], [0]>} : vector<2x8x16xf32>, vector<2x16x8xf32>, vector<2x8x8xf32> -> vector<2x8x8xf32>
    "tpu.trace_stop"() : () -> ()
    %c0_9 = arith.constant 0 : index
    %c0_10 = arith.constant 0 : index
    %c0_11 = arith.constant 0 : index
    %19 = vector.load %arg3[%c0_9, %c0_10, %c0_11] : memref<2x8x32xf32, #tpu.memory_space<vmem>>, vector<2x8x8xf32>
    tpu.vector_store %arg3[%c0_9, %c0_10, %c0_11], %18 {strides = array<i32>} : memref<2x8x32xf32, #tpu.memory_space<vmem>>, vector<2x8x8xf32>,
    %20 = vector.extract_strided_slice %0 {offsets = [0, 0, 8], sizes = [2, 8, 8], strides = [1, 1, 1]} : vector<2x8x32xf32> to vector<2x8x8xf32>
    %21 = vector.extract_strided_slice %1 {offsets = [0, 0, 16], sizes = [2, 16, 8], strides = [1, 1, 1]} : vector<2x16x64xf32> to vector<2x16x8xf32>
    %22 = vector.extract_strided_slice %1 {offsets = [0, 0, 24], sizes = [2, 16, 8], strides = [1, 1, 1]} : vector<2x16x64xf32> to vector<2x16x8xf32>
    "tpu.trace_start"() <{level = 10 : i32, message = "btc,bsc->bts"}> : () -> ()
    %cst_12 = arith.constant dense<0.000000e+00> : vector<2x8x16xf32>
    %23 = tpu.matmul %20, %21, %cst_12 {dimension_numbers = #tpu.dot_dimension_numbers<[2], [2], [1], [1], [0, 0, 0, 1, 1, 1], [0], [0]>} : vector<2x8x8xf32>, vector<2x16x8xf32>, vector<2x8x16xf32> -> vector<2x8x16xf32>
    "tpu.trace_stop"() : () -> ()
    %cst_13 = arith.constant 0.353553385 : f32
    %24 = vector.broadcast %cst_13 : f32 to vector<2x8x16xf32>
    %25 = arith.mulf %23, %24 : vector<2x8x16xf32>
    %cst_14 = arith.constant dense<0xFF800000> : vector<2x8xf32>
    %26 = vector.multi_reduction <maximumf>, %25, %cst_14 [2] : vector<2x8x16xf32> to vector<2x8xf32>
    %27 = vector.shape_cast %26 : vector<2x8xf32> to vector<2x8x1xf32>
    %28 = vector.broadcast %27 : vector<2x8x1xf32> to vector<2x8x16xf32>
    %29 = arith.subf %25, %28 : vector<2x8x16xf32>
    %30 = math.exp %29 : vector<2x8x16xf32>
    %cst_15 = arith.constant dense<0.000000e+00> : vector<2x8xf32>
    %31 = vector.multi_reduction <add>, %30, %cst_15 [2] : vector<2x8x16xf32> to vector<2x8xf32>
    %32 = vector.shape_cast %31 : vector<2x8xf32> to vector<2x8x1xf32>
    %33 = tpu.reciprocal %32 : vector<2x8x1xf32> -> vector<2x8x1xf32>
    %34 = vector.broadcast %33 : vector<2x8x1xf32> to vector<2x8x16xf32>
    %35 = arith.mulf %30, %34 : vector<2x8x16xf32>
    "tpu.trace_start"() <{level = 10 : i32, message = "bts,bsc->btc"}> : () -> ()
    %cst_16 = arith.constant dense<0.000000e+00> : vector<2x8x8xf32>
    %36 = tpu.matmul %35, %22, %cst_16 {dimension_numbers = #tpu.dot_dimension_numbers<[2], [1], [1], [2], [0, 0, 0, 1, 1, 2], [0], [0]>} : vector<2x8x16xf32>, vector<2x16x8xf32>, vector<2x8x8xf32> -> vector<2x8x8xf32>
    "tpu.trace_stop"() : () -> ()
    %c0_17 = arith.constant 0 : index
    %c0_18 = arith.constant 0 : index
    %c8 = arith.constant 8 : index
    %37 = vector.load %arg3[%c0_17, %c0_18, %c8] : memref<2x8x32xf32, #tpu.memory_space<vmem>>, vector<2x8x8xf32>
    tpu.vector_store %arg3[%c0_17, %c0_18, %c8], %36 {strides = array<i32>} : memref<2x8x32xf32, #tpu.memory_space<vmem>>, vector<2x8x8xf32>,
    %38 = vector.extract_strided_slice %0 {offsets = [0, 0, 16], sizes = [2, 8, 8], strides = [1, 1, 1]} : vector<2x8x32xf32> to vector<2x8x8xf32>
    %39 = vector.extract_strided_slice %1 {offsets = [0, 0, 32], sizes = [2, 16, 8], strides = [1, 1, 1]} : vector<2x16x64xf32> to vector<2x16x8xf32>
    %40 = vector.extract_strided_slice %1 {offsets = [0, 0, 40], sizes = [2, 16, 8], strides = [1, 1, 1]} : vector<2x16x64xf32> to vector<2x16x8xf32>
    "tpu.trace_start"() <{level = 10 : i32, message = "btc,bsc->bts"}> : () -> ()
    %cst_19 = arith.constant dense<0.000000e+00> : vector<2x8x16xf32>
    %41 = tpu.matmul %38, %39, %cst_19 {dimension_numbers = #tpu.dot_dimension_numbers<[2], [2], [1], [1], [0, 0, 0, 1, 1, 1], [0], [0]>} : vector<2x8x8xf32>, vector<2x16x8xf32>, vector<2x8x16xf32> -> vector<2x8x16xf32>
    "tpu.trace_stop"() : () -> ()
    %cst_20 = arith.constant 0.353553385 : f32
    %42 = vector.broadcast %cst_20 : f32 to vector<2x8x16xf32>
    %43 = arith.mulf %41, %42 : vector<2x8x16xf32>
    %cst_21 = arith.constant dense<0xFF800000> : vector<2x8xf32>
    %44 = vector.multi_reduction <maximumf>, %43, %cst_21 [2] : vector<2x8x16xf32> to vector<2x8xf32>
    %45 = vector.shape_cast %44 : vector<2x8xf32> to vector<2x8x1xf32>
    %46 = vector.broadcast %45 : vector<2x8x1xf32> to vector<2x8x16xf32>
    %47 = arith.subf %43, %46 : vector<2x8x16xf32>
    %48 = math.exp %47 : vector<2x8x16xf32>
    %cst_22 = arith.constant dense<0.000000e+00> : vector<2x8xf32>
    %49 = vector.multi_reduction <add>, %48, %cst_22 [2] : vector<2x8x16xf32> to vector<2x8xf32>
    %50 = vector.shape_cast %49 : vector<2x8xf32> to vector<2x8x1xf32>
    %51 = tpu.reciprocal %50 : vector<2x8x1xf32> -> vector<2x8x1xf32>
    %52 = vector.broadcast %51 : vector<2x8x1xf32> to vector<2x8x16xf32>
    %53 = arith.mulf %48, %52 : vector<2x8x16xf32>
    "tpu.trace_start"() <{level = 10 : i32, message = "bts,bsc->btc"}> : () -> ()
    %cst_23 = arith.constant dense<0.000000e+00> : vector<2x8x8xf32>
    %54 = tpu.matmul %53, %40, %cst_23 {dimension_numbers = #tpu.dot_dimension_numbers<[2], [1], [1], [2], [0, 0, 0, 1, 1, 2], [0], [0]>} : vector<2x8x16xf32>, vector<2x16x8xf32>, vector<2x8x8xf32> -> vector<2x8x8xf32>
    "tpu.trace_stop"() : () -> ()
    %c0_24 = arith.constant 0 : index
    %c0_25 = arith.constant 0 : index
    %c16 = arith.constant 16 : index
    %55 = vector.load %arg3[%c0_24, %c0_25, %c16] : memref<2x8x32xf32, #tpu.memory_space<vmem>>, vector<2x8x8xf32>
    tpu.vector_store %arg3[%c0_24, %c0_25, %c16], %54 {strides = array<i32>} : memref<2x8x32xf32, #tpu.memory_space<vmem>>, vector<2x8x8xf32>,
    %56 = vector.extract_strided_slice %0 {offsets = [0, 0, 24], sizes = [2, 8, 8], strides = [1, 1, 1]} : vector<2x8x32xf32> to vector<2x8x8xf32>
    %57 = vector.extract_strided_slice %1 {offsets = [0, 0, 48], sizes = [2, 16, 8], strides = [1, 1, 1]} : vector<2x16x64xf32> to vector<2x16x8xf32>
    %58 = vector.extract_strided_slice %1 {offsets = [0, 0, 56], sizes = [2, 16, 8], strides = [1, 1, 1]} : vector<2x16x64xf32> to vector<2x16x8xf32>
    "tpu.trace_start"() <{level = 10 : i32, message = "btc,bsc->bts"}> : () -> ()
    %cst_26 = arith.constant dense<0.000000e+00> : vector<2x8x16xf32>
    %59 = tpu.matmul %56, %57, %cst_26 {dimension_numbers = #tpu.dot_dimension_numbers<[2], [2], [1], [1], [0, 0, 0, 1, 1, 1], [0], [0]>} : vector<2x8x8xf32>, vector<2x16x8xf32>, vector<2x8x16xf32> -> vector<2x8x16xf32>
    "tpu.trace_stop"() : () -> ()
    %cst_27 = arith.constant 0.353553385 : f32
    %60 = vector.broadcast %cst_27 : f32 to vector<2x8x16xf32>
    %61 = arith.mulf %59, %60 : vector<2x8x16xf32>
    %cst_28 = arith.constant dense<0xFF800000> : vector<2x8xf32>
    %62 = vector.multi_reduction <maximumf>, %61, %cst_28 [2] : vector<2x8x16xf32> to vector<2x8xf32>
    %63 = vector.shape_cast %62 : vector<2x8xf32> to vector<2x8x1xf32>
    %64 = vector.broadcast %63 : vector<2x8x1xf32> to vector<2x8x16xf32>
    %65 = arith.subf %61, %64 : vector<2x8x16xf32>
    %66 = math.exp %65 : vector<2x8x16xf32>
    %cst_29 = arith.constant dense<0.000000e+00> : vector<2x8xf32>
    %67 = vector.multi_reduction <add>, %66, %cst_29 [2] : vector<2x8x16xf32> to vector<2x8xf32>
    %68 = vector.shape_cast %67 : vector<2x8xf32> to vector<2x8x1xf32>
    %69 = tpu.reciprocal %68 : vector<2x8x1xf32> -> vector<2x8x1xf32>
    %70 = vector.broadcast %69 : vector<2x8x1xf32> to vector<2x8x16xf32>
    %71 = arith.mulf %66, %70 : vector<2x8x16xf32>
    "tpu.trace_start"() <{level = 10 : i32, message = "bts,bsc->btc"}> : () -> ()
    %cst_30 = arith.constant dense<0.000000e+00> : vector<2x8x8xf32>
    %72 = tpu.matmul %71, %58, %cst_30 {dimension_numbers = #tpu.dot_dimension_numbers<[2], [1], [1], [2], [0, 0, 0, 1, 1, 2], [0], [0]>} : vector<2x8x16xf32>, vector<2x16x8xf32>, vector<2x8x8xf32> -> vector<2x8x8xf32>
    "tpu.trace_stop"() : () -> ()
    %c0_31 = arith.constant 0 : index
    %c0_32 = arith.constant 0 : index
    %c24 = arith.constant 24 : index
    %73 = vector.load %arg3[%c0_31, %c0_32, %c24] : memref<2x8x32xf32, #tpu.memory_space<vmem>>, vector<2x8x8xf32>
    tpu.vector_store %arg3[%c0_31, %c0_32, %c24], %72 {strides = array<i32>} : memref<2x8x32xf32, #tpu.memory_space<vmem>>, vector<2x8x8xf32>,
    return
  }
  func.func @transform_0(%arg0: i32) -> (i32, i32, i32) {
    %c0_i32 = arith.constant 0 : i32
    %c0_i32_0 = arith.constant 0 : i32
    %c0_i32_1 = arith.constant 0 : i32
    %c0_i32_2 = arith.constant 0 : i32
    return %c0_i32, %c0_i32_0, %c0_i32_1 : i32, i32, i32
  }
  func.func @transform_1(%arg0: i32) -> (i32, i32, i32) {
    %c0_i32 = arith.constant 0 : i32
    %c0_i32_0 = arith.constant 0 : i32
    %c0_i32_1 = arith.constant 0 : i32
    %c0_i32_2 = arith.constant 0 : i32
    return %c0_i32, %c0_i32_0, %c0_i32_1 : i32, i32, i32
  }
  func.func @transform_2(%arg0: i32) -> (i32, i32, i32) {
    %c0_i32 = arith.constant 0 : i32
    %c0_i32_0 = arith.constant 0 : i32
    %c0_i32_1 = arith.constant 0 : i32
    %c0_i32_2 = arith.constant 0 : i32
    return %c0_i32, %c0_i32_0, %c0_i32_1 : i32, i32, i32
  }
}

</mosaic_0001>

<llo_original>
// kernel: tpu_custom_call.1
$region0: #{tpu_custom_call.1}
  #allocation0 [shape = 'u32[]', space=smem, size = 0x4, offset = 0x4, fixed_abs, tag = 'smem constant byte address 0x4 - core index']
  #allocation1 [shape = 'u32[144,128]{1,0:T(1,128)}', space=vmem, size = 0x12000, scoped, tag = 'internal scratch']
  %s0 = inlined_call_operand.hbm [shape: f32[2,8,32], index: 0, kind: input, shape index: {}]
  %s1 = inlined_call_operand.hbm [shape: f32[2,16,64], index: 1, kind: input, shape index: {}]
  %s2 = inlined_call_operand.hbm [shape: f32[2,8,32], index: 2, kind: output, shape index: {}]
  %s3 = sld [smem:[#allocation0]]
  $region26: #{tpu_custom_call.1} parent=0
    _
  %s5 = ssub.s32 1, %s3
  %s6 = scalar_select 0, %s5, %s3
  $region1: #{tpu_custom_call.1} parent=0
    #allocation2 [shape = 'u8[8192]{0}', space=vmem, size = 0x2000, scoped, tag = 'input window, operand 0, single buffered']
    #allocation3 [shape = 's32[1]{0}', space=sflag, size = 0x4, scoped, tag = 'scoped memory for tpu_custom_call.1']
    #allocation4 [shape = 's32[1]{0}', space=sflag, size = 0x4, scoped, tag = 'scoped memory for tpu_custom_call.1']
    #allocation5 [shape = 'u8[16384]{0}', space=vmem, size = 0x4000, scoped, tag = 'input window, operand 1, single buffered']
    #allocation6 [shape = 's32[1]{0}', space=sflag, size = 0x4, scoped, tag = 'scoped memory for tpu_custom_call.1']
    #allocation7 [shape = 'u8[8192]{0}', space=vmem, size = 0x2000, scoped, tag = 'output window, operand 0, single buffered']
    %7 = vsyncpa [#allocation3], 0
    %8 = vsyncpa [#allocation6], 0
    %9 = vsyncpa [#allocation4], 0
    // Predicated region
    $region2: #{tpu_custom_call.1} parent=1 // pred_check
      _
    $region3: #{tpu_custom_call.1} parent=1 // pred_check_branch
      %11 = sbr.rel (0) target = $region5
    $region4: #{tpu_custom_call.1} parent=1 // pred_region
      %s13 = ssub.s32 256, 256
      %14 = vsyncadd [#allocation3], %s13
      %s15 = sshll.u32 [#allocation2], 4
      %s16 = int_to_ptr.vmem [resolvable:$true] %s15
      %21 = dma.hbm_to_vmem [thread:$0]  %s0, 256, %s16, [#allocation3], 128, 128, 8
    $region5: #{tpu_custom_call.1} parent=1 // pred_fallthru
      _
    // Predicated region
    $region6: #{tpu_custom_call.1} parent=1 // pred_check
      _
    $region7: #{tpu_custom_call.1} parent=1 // pred_check_branch
      %23 = sbr.rel (0) target = $region9
    $region8: #{tpu_custom_call.1} parent=1 // pred_region
      %s25 = ssub.s32 512, 512
      %26 = vsyncadd [#allocation6], %s25
      %s27 = sshll.u32 [#allocation5], 4
      %s28 = int_to_ptr.vmem [resolvable:$true] %s27
      %33 = dma.hbm_to_vmem [thread:$0]  %s1, 512, %s28, [#allocation6], 128, 128, 8
    $region9: #{tpu_custom_call.1} parent=1 // pred_fallthru
      _
    // Predicated region
    $region10: #{tpu_custom_call.1} parent=1 // pred_check
      _
    $region11: #{tpu_custom_call.1} parent=1 // pred_check_branch
      %35 = sbr.rel (0) target = $region13
    $region12: #{tpu_custom_call.1} parent=1 // pred_region
      %36 = dma.done [#allocation3], 256
    $region13: #{tpu_custom_call.1} parent=1 // pred_fallthru
      _
    // Predicated region
    $region14: #{tpu_custom_call.1} parent=1 // pred_check
      _
    $region15: #{tpu_custom_call.1} parent=1 // pred_check_branch
      %38 = sbr.rel (0) target = $region17
    $region16: #{tpu_custom_call.1} parent=1 // pred_region
      %39 = dma.done [#allocation6], 512
    $region17: #{tpu_custom_call.1} parent=1 // pred_fallthru
      _
    %v40 = vld [vmem:[#allocation2] sm:$0xff]
    %v41 = vld [vmem:[#allocation2 + $0x8] sm:$0xff]
    %v42 = vld [vmem:[#allocation5] sm:$0xff]
    %v43 = vld [vmem:[#allocation5 + $0x8] sm:$0xff]
    %v44 = vld [vmem:[#allocation5 + $0x10] sm:$0xff]
    %v45 = vld [vmem:[#allocation5 + $0x18] sm:$0xff]
    %vm46 = vcmask 64512
    %v48 = vsel %vm46, %v40, 0
    %v51 = vsel %vm46, %v42, 0
    %v54 = vsel %vm46, %v43, 0
    %56 = vmatprep.subr.mxu0 0.0
    %57 = vmatpush1.xpose.msra.mxu0 %v51
    %58 = vmatprep.subr.mxu0 0.0
    %59 = vmatpush1.xpose.msra.mxu0 %v54
    %60 = vmatprep.subr.mxu0 0.0
    %61 = vmatpush1.xpose.msra.mxu0 0.0
    %62 = vmatprep.subr.mxu0 0.0
    %63 = vmatpush1.xpose.msra.mxu0 0.0
    %64 = vmatprep.subr.mxu0 0.0
    %65 = vmatpush1.xpose.msra.mxu0 0.0
    %66 = vmatprep.subr.mxu0 0.0
    %67 = vmatpush1.xpose.msra.mxu0 0.0
    %68 = vmatprep.subr.mxu0 0.0
    %69 = vmatpush1.xpose.msra.mxu0 0.0
    %70 = vmatprep.subr.mxu0 0.0
    %71 = vmatpush1.xpose.msra.mxu0 0.0
    %72 = vmatprep.subr.mxu0 0.0
    %73 = vmatpush1.xpose.msra.mxu0 0.0
    %74 = vmatprep.subr.mxu0 0.0
    %75 = vmatpush1.xpose.msra.mxu0 0.0
    %76 = vmatprep.subr.mxu0 0.0
    %77 = vmatpush1.xpose.msra.mxu0 0.0
    %78 = vmatprep.subr.mxu0 0.0
    %79 = vmatpush1.xpose.msra.mxu0 0.0
    %80 = vmatprep.subr.mxu0 0.0
    %81 = vmatpush1.xpose.msra.mxu0 0.0
    %82 = vmatprep.subr.mxu0 0.0
    %83 = vmatpush1.xpose.msra.mxu0 0.0
    %84 = vmatprep.subr.mxu0 0.0
    %85 = vmatpush1.xpose.msra.mxu0 0.0
    %86 = vmatprep.subr.mxu0 0.0
    %87 = vmatpush1.xpose.msra.mxu0 0.0
    %88 = vmatprep.subr.mxu0 0.0
    %89 = vmatpush1.xpose.msra.mxu0 0.0
    %90 = vmatprep.subr.mxu0 0.0
    %91 = vmatpush1.xpose.msra.mxu0 0.0
    %92 = vmatprep.subr.mxu0 0.0
    %93 = vmatpush1.xpose.msra.mxu0 0.0
    %94 = vmatprep.subr.mxu0 0.0
    %95 = vmatpush1.xpose.msra.mxu0 0.0
    %96 = vmatprep.subr.mxu0 0.0
    %97 = vmatpush1.xpose.msra.mxu0 0.0
    %98 = vmatprep.subr.mxu0 0.0
    %99 = vmatpush1.xpose.msra.mxu0 0.0
    %100 = vmatprep.subr.mxu0 0.0
    %101 = vmatpush1.xpose.msra.mxu0 0.0
    %102 = vmatprep.subr.mxu0 0.0
    %103 = vmatpush1.xpose.msra.mxu0 0.0
    %104 = vmatprep.subr.mxu0 0.0
    %105 = vmatpush1.xpose.msra.mxu0 0.0
    %106 = vmatprep.subr.mxu0 0.0
    %107 = vmatpush1.xpose.msra.mxu0 0.0
    %108 = vmatprep.subr.mxu0 0.0
    %109 = vmatpush1.xpose.msra.mxu0 0.0
    %110 = vmatprep.subr.mxu0 0.0
    %111 = vmatpush1.xpose.msra.mxu0 0.0
    %112 = vmatprep.subr.mxu0 0.0
    %113 = vmatpush1.xpose.msra.mxu0 0.0
    %114 = vmatprep.subr.mxu0 0.0
    %115 = vmatpush1.xpose.msra.mxu0 0.0
    %116 = vmatprep.subr.mxu0 0.0
    %117 = vmatpush1.xpose.msra.mxu0 0.0
    %118 = vmatprep.subr.mxu0 0.0
    %119 = vmatpush1.xpose.msra.mxu0 0.0
    %120 = vmatprep.mubr.f32.mxu0 0.0
    %121 = vmatmul.mubr.f32.gmra.mrb[0].mxu0 %v48
    %v122 = vpop.f32.mrb[0].mxu0
    %v123 = vadd.f32 0.0, %v122
    %v124 = vpop.f32.mrb[0].mxu0
    %125 = vdwg.mxu0
    %v127 = vsel %vm46, %v41, 0
    %v130 = vsel %vm46, %v44, 0
    %v133 = vsel %vm46, %v45, 0
    %135 = vmatprep.subr.mxu0 0.0
    %136 = vmatpush1.xpose.msra.mxu0 %v130
    %137 = vmatprep.subr.mxu0 0.0
    %138 = vmatpush1.xpose.msra.mxu0 %v133
    %139 = vmatprep.subr.mxu0 0.0
    %140 = vmatpush1.xpose.msra.mxu0 0.0
    %141 = vmatprep.subr.mxu0 0.0
    %142 = vmatpush1.xpose.msra.mxu0 0.0
    %143 = vmatprep.subr.mxu0 0.0
    %144 = vmatpush1.xpose.msra.mxu0 0.0
    %145 = vmatprep.subr.mxu0 0.0
    %146 = vmatpush1.xpose.msra.mxu0 0.0
    %147 = vmatprep.subr.mxu0 0.0
    %148 = vmatpush1.xpose.msra.mxu0 0.0
    %149 = vmatprep.subr.mxu0 0.0
    %150 = vmatpush1.xpose.msra.mxu0 0.0
    %151 = vmatprep.subr.mxu0 0.0
    %152 = vmatpush1.xpose.msra.mxu0 0.0
    %153 = vmatprep.subr.mxu0 0.0
    %154 = vmatpush1.xpose.msra.mxu0 0.0
    %155 = vmatprep.subr.mxu0 0.0
    %156 = vmatpush1.xpose.msra.mxu0 0.0
    %157 = vmatprep.subr.mxu0 0.0
    %158 = vmatpush1.xpose.msra.mxu0 0.0
    %159 = vmatprep.subr.mxu0 0.0
    %160 = vmatpush1.xpose.msra.mxu0 0.0
    %161 = vmatprep.subr.mxu0 0.0
    %162 = vmatpush1.xpose.msra.mxu0 0.0
    %163 = vmatprep.subr.mxu0 0.0
    %164 = vmatpush1.xpose.msra.mxu0 0.0
    %165 = vmatprep.subr.mxu0 0.0
    %166 = vmatpush1.xpose.msra.mxu0 0.0
    %167 = vmatprep.subr.mxu0 0.0
    %168 = vmatpush1.xpose.msra.mxu0 0.0
    %169 = vmatprep.subr.mxu0 0.0
    %170 = vmatpush1.xpose.msra.mxu0 0.0
    %171 = vmatprep.subr.mxu0 0.0
    %172 = vmatpush1.xpose.msra.mxu0 0.0
    %173 = vmatprep.subr.mxu0 0.0
    %174 = vmatpush1.xpose.msra.mxu0 0.0
    %175 = vmatprep.subr.mxu0 0.0
    %176 = vmatpush1.xpose.msra.mxu0 0.0
    %177 = vmatprep.subr.mxu0 0.0
    %178 = vmatpush1.xpose.msra.mxu0 0.0
    %179 = vmatprep.subr.mxu0 0.0
    %180 = vmatpush1.xpose.msra.mxu0 0.0
    %181 = vmatprep.subr.mxu0 0.0
    %182 = vmatpush1.xpose.msra.mxu0 0.0
    %183 = vmatprep.subr.mxu0 0.0
    %184 = vmatpush1.xpose.msra.mxu0 0.0
    %185 = vmatprep.subr.mxu0 0.0
    %186 = vmatpush1.xpose.msra.mxu0 0.0
    %187 = vmatprep.subr.mxu0 0.0
    %188 = vmatpush1.xpose.msra.mxu0 0.0
    %189 = vmatprep.subr.mxu0 0.0
    %190 = vmatpush1.xpose.msra.mxu0 0.0
    %191 = vmatprep.subr.mxu0 0.0
    %192 = vmatpush1.xpose.msra.mxu0 0.0
    %193 = vmatprep.subr.mxu0 0.0
    %194 = vmatpush1.xpose.msra.mxu0 0.0
    %195 = vmatprep.subr.mxu0 0.0
    %196 = vmatpush1.xpose.msra.mxu0 0.0
    %197 = vmatprep.subr.mxu0 0.0
    %198 = vmatpush1.xpose.msra.mxu0 0.0
    %199 = vmatprep.mubr.f32.mxu0 0.0
    %200 = vmatmul.mubr.f32.gmra.mrb[0].mxu0 %v127
    %v201 = vpop.f32.mrb[0].mxu0
    %v202 = vadd.f32 0.0, %v201
    %v203 = vpop.f32.mrb[0].mxu0
    %204 = vdwg.mxu0
    %v205 = vmul.f32 %v123, 0.35355338
    %v206 = vmul.f32 %v202, 0.35355338
    %vm207 = vcmask 130048
    %v208 = vsel %vm207, %v205, -inf
    %209 = vmax.xlane.f32.xlu0 %v208
    %v210 = vpop.xlane.xlu0 %209
    %v211 = vsel %vm207, %v206, -inf
    %212 = vmax.xlane.f32.xlu0 %v211
    %v213 = vpop.xlane.xlu0 %212
    %v214 = vsub.f32 %v205, %v210
    %v215 = vsub.f32 %v206, %v213
    %v216 = vmul.f32 %v214, 1.442695
    %v217 = vpow.pop %v216
    %v218 = vmul.f32 %v215, 1.442695
    %v219 = vpow.pop %v218
    %v220 = vsel %vm207, %v217, 0.0
    %221 = vadd.xlane.f32.xlu0 %v220
    %v222 = vpop.xlane.xlu0 %221
    %v223 = vsel %vm207, %v219, 0.0
    %224 = vadd.xlane.f32.xlu0 %v223
    %v225 = vpop.xlane.xlu0 %224
    %v226 = vrcp.pop %v222
    %v227 = vrcp.pop %v225
    %v228 = vmul.f32 %v217, %v226
    %v229 = vmul.f32 %v219, %v227
    %230 = vrot.lane.b32.xlu0 %v42, 120
    %v231 = vpop.permute.xlu0 %230
    %232 = vrot.lane.b32.xlu0 %v43, 120
    %v233 = vpop.permute.xlu0 %232
    %v237 = vsel %vm207, %v228, 0
    %239 = vmatprep.subr.mxu0 0.0
    %240 = vmatpush1.msra.mxu0 %v231
    %241 = vmatprep.subr.mxu0 0.0
    %242 = vmatpush1.msra.mxu0 %v233
    %243 = vmatprep.subr.mxu0 0.0
    %244 = vmatpush1.msra.mxu0 0.0
    %245 = vmatprep.subr.mxu0 0.0
    %246 = vmatpush1.msra.mxu0 0.0
    %247 = vmatprep.subr.mxu0 0.0
    %248 = vmatpush1.msra.mxu0 0.0
    %249 = vmatprep.subr.mxu0 0.0
    %250 = vmatpush1.msra.mxu0 0.0
    %251 = vmatprep.subr.mxu0 0.0
    %252 = vmatpush1.msra.mxu0 0.0
    %253 = vmatprep.subr.mxu0 0.0
    %254 = vmatpush1.msra.mxu0 0.0
    %255 = vmatprep.subr.mxu0 0.0
    %256 = vmatpush1.msra.mxu0 0.0
    %257 = vmatprep.subr.mxu0 0.0
    %258 = vmatpush1.msra.mxu0 0.0
    %259 = vmatprep.subr.mxu0 0.0
    %260 = vmatpush1.msra.mxu0 0.0
    %261 = vmatprep.subr.mxu0 0.0
    %262 = vmatpush1.msra.mxu0 0.0
    %263 = vmatprep.subr.mxu0 0.0
    %264 = vmatpush1.msra.mxu0 0.0
    %265 = vmatprep.subr.mxu0 0.0
    %266 = vmatpush1.msra.mxu0 0.0
    %267 = vmatprep.subr.mxu0 0.0
    %268 = vmatpush1.msra.mxu0 0.0
    %269 = vmatprep.subr.mxu0 0.0
    %270 = vmatpush1.msra.mxu0 0.0
    %271 = vmatprep.subr.mxu0 0.0
    %272 = vmatpush1.msra.mxu0 0.0
    %273 = vmatprep.subr.mxu0 0.0
    %274 = vmatpush1.msra.mxu0 0.0
    %275 = vmatprep.subr.mxu0 0.0
    %276 = vmatpush1.msra.mxu0 0.0
    %277 = vmatprep.subr.mxu0 0.0
    %278 = vmatpush1.msra.mxu0 0.0
    %279 = vmatprep.subr.mxu0 0.0
    %280 = vmatpush1.msra.mxu0 0.0
    %281 = vmatprep.subr.mxu0 0.0
    %282 = vmatpush1.msra.mxu0 0.0
    %283 = vmatprep.subr.mxu0 0.0
    %284 = vmatpush1.msra.mxu0 0.0
    %285 = vmatprep.subr.mxu0 0.0
    %286 = vmatpush1.msra.mxu0 0.0
    %287 = vmatprep.subr.mxu0 0.0
    %288 = vmatpush1.msra.mxu0 0.0
    %289 = vmatprep.subr.mxu0 0.0
    %290 = vmatpush1.msra.mxu0 0.0
    %291 = vmatprep.subr.mxu0 0.0
    %292 = vmatpush1.msra.mxu0 0.0
    %293 = vmatprep.subr.mxu0 0.0
    %294 = vmatpush1.msra.mxu0 0.0
    %295 = vmatprep.subr.mxu0 0.0
    %296 = vmatpush1.msra.mxu0 0.0
    %297 = vmatprep.subr.mxu0 0.0
    %298 = vmatpush1.msra.mxu0 0.0
    %299 = vmatprep.subr.mxu0 0.0
    %300 = vmatpush1.msra.mxu0 0.0
    %301 = vmatprep.subr.mxu0 0.0
    %302 = vmatpush1.msra.mxu0 0.0
    %303 = vmatprep.mubr.f32.mxu0 0.0
    %304 = vmatmul.mubr.f32.gmra.mrb[0].mxu0 %v237
    %v305 = vpop.f32.mrb[0].mxu0
    %v306 = vadd.f32 0.0, %v305
    %v307 = vpop.f32.mrb[0].mxu0
    %308 = vdwg.mxu0
    %309 = vrot.lane.b32.xlu0 %v44, 120
    %v310 = vpop.permute.xlu0 %309
    %311 = vrot.lane.b32.xlu0 %v45, 120
    %v312 = vpop.permute.xlu0 %311
    %v316 = vsel %vm207, %v229, 0
    %318 = vmatprep.subr.mxu0 0.0
    %319 = vmatpush1.msra.mxu0 %v310
    %320 = vmatprep.subr.mxu0 0.0
    %321 = vmatpush1.msra.mxu0 %v312
    %322 = vmatprep.subr.mxu0 0.0
    %323 = vmatpush1.msra.mxu0 0.0
    %324 = vmatprep.subr.mxu0 0.0
    %325 = vmatpush1.msra.mxu0 0.0
    %326 = vmatprep.subr.mxu0 0.0
    %327 = vmatpush1.msra.mxu0 0.0
    %328 = vmatprep.subr.mxu0 0.0
    %329 = vmatpush1.msra.mxu0 0.0
    %330 = vmatprep.subr.mxu0 0.0
    %331 = vmatpush1.msra.mxu0 0.0
    %332 = vmatprep.subr.mxu0 0.0
    %333 = vmatpush1.msra.mxu0 0.0
    %334 = vmatprep.subr.mxu0 0.0
    %335 = vmatpush1.msra.mxu0 0.0
    %336 = vmatprep.subr.mxu0 0.0
    %337 = vmatpush1.msra.mxu0 0.0
    %338 = vmatprep.subr.mxu0 0.0
    %339 = vmatpush1.msra.mxu0 0.0
    %340 = vmatprep.subr.mxu0 0.0
    %341 = vmatpush1.msra.mxu0 0.0
    %342 = vmatprep.subr.mxu0 0.0
    %343 = vmatpush1.msra.mxu0 0.0
    %344 = vmatprep.subr.mxu0 0.0
    %345 = vmatpush1.msra.mxu0 0.0
    %346 = vmatprep.subr.mxu0 0.0
    %347 = vmatpush1.msra.mxu0 0.0
    %348 = vmatprep.subr.mxu0 0.0
    %349 = vmatpush1.msra.mxu0 0.0
    %350 = vmatprep.subr.mxu0 0.0
    %351 = vmatpush1.msra.mxu0 0.0
    %352 = vmatprep.subr.mxu0 0.0
    %353 = vmatpush1.msra.mxu0 0.0
    %354 = vmatprep.subr.mxu0 0.0
    %355 = vmatpush1.msra.mxu0 0.0
    %356 = vmatprep.subr.mxu0 0.0
    %357 = vmatpush1.msra.mxu0 0.0
    %358 = vmatprep.subr.mxu0 0.0
    %359 = vmatpush1.msra.mxu0 0.0
    %360 = vmatprep.subr.mxu0 0.0
    %361 = vmatpush1.msra.mxu0 0.0
    %362 = vmatprep.subr.mxu0 0.0
    %363 = vmatpush1.msra.mxu0 0.0
    %364 = vmatprep.subr.mxu0 0.0
    %365 = vmatpush1.msra.mxu0 0.0
    %366 = vmatprep.subr.mxu0 0.0
    %367 = vmatpush1.msra.mxu0 0.0
    %368 = vmatprep.subr.mxu0 0.0
    %369 = vmatpush1.msra.mxu0 0.0
    %370 = vmatprep.subr.mxu0 0.0
    %371 = vmatpush1.msra.mxu0 0.0
    %372 = vmatprep.subr.mxu0 0.0
    %373 = vmatpush1.msra.mxu0 0.0
    %374 = vmatprep.subr.mxu0 0.0
    %375 = vmatpush1.msra.mxu0 0.0
    %376 = vmatprep.subr.mxu0 0.0
    %377 = vmatpush1.msra.mxu0 0.0
    %378 = vmatprep.subr.mxu0 0.0
    %379 = vmatpush1.msra.mxu0 0.0
    %380 = vmatprep.subr.mxu0 0.0
    %381 = vmatpush1.msra.mxu0 0.0
    %382 = vmatprep.mubr.f32.mxu0 0.0
    %383 = vmatmul.mubr.f32.gmra.mrb[0].mxu0 %v316
    %v384 = vpop.f32.mrb[0].mxu0
    %v385 = vadd.f32 0.0, %v384
    %v386 = vpop.f32.mrb[0].mxu0
    %387 = vdwg.mxu0
    %388 = vst.msk [vmem:[#allocation7] sm:$0xff] %vm46, %v306
    %389 = vst.msk [vmem:[#allocation7 + $0x8] sm:$0xff] %vm46, %v385
    %390 = vrot.lane.b32.xlu0 %v40, 120
    %v391 = vpop.permute.xlu0 %390
    %392 = vrot.lane.b32.xlu0 %v42, 112
    %v393 = vpop.permute.xlu0 %392
    %394 = vrot.lane.b32.xlu0 %v43, 112
    %v395 = vpop.permute.xlu0 %394
    %v396 = vsel %vm46, %v391, 0
    %v398 = vsel %vm46, %v393, 0
    %v400 = vsel %vm46, %v395, 0
    %402 = vmatprep.subr.mxu0 0.0
    %403 = vmatpush1.xpose.msra.mxu0 %v398
    %404 = vmatprep.subr.mxu0 0.0
    %405 = vmatpush1.xpose.msra.mxu0 %v400
    %406 = vmatprep.subr.mxu0 0.0
    %407 = vmatpush1.xpose.msra.mxu0 0.0
    %408 = vmatprep.subr.mxu0 0.0
    %409 = vmatpush1.xpose.msra.mxu0 0.0
    %410 = vmatprep.subr.mxu0 0.0
    %411 = vmatpush1.xpose.msra.mxu0 0.0
    %412 = vmatprep.subr.mxu0 0.0
    %413 = vmatpush1.xpose.msra.mxu0 0.0
    %414 = vmatprep.subr.mxu0 0.0
    %415 = vmatpush1.xpose.msra.mxu0 0.0
    %416 = vmatprep.subr.mxu0 0.0
    %417 = vmatpush1.xpose.msra.mxu0 0.0
    %418 = vmatprep.subr.mxu0 0.0
    %419 = vmatpush1.xpose.msra.mxu0 0.0
    %420 = vmatprep.subr.mxu0 0.0
    %421 = vmatpush1.xpose.msra.mxu0 0.0
    %422 = vmatprep.subr.mxu0 0.0
    %423 = vmatpush1.xpose.msra.mxu0 0.0
    %424 = vmatprep.subr.mxu0 0.0
    %425 = vmatpush1.xpose.msra.mxu0 0.0
    %426 = vmatprep.subr.mxu0 0.0
    %427 = vmatpush1.xpose.msra.mxu0 0.0
    %428 = vmatprep.subr.mxu0 0.0
    %429 = vmatpush1.xpose.msra.mxu0 0.0
    %430 = vmatprep.subr.mxu0 0.0
    %431 = vmatpush1.xpose.msra.mxu0 0.0
    %432 = vmatprep.subr.mxu0 0.0
    %433 = vmatpush1.xpose.msra.mxu0 0.0
    %434 = vmatprep.subr.mxu0 0.0
    %435 = vmatpush1.xpose.msra.mxu0 0.0
    %436 = vmatprep.subr.mxu0 0.0
    %437 = vmatpush1.xpose.msra.mxu0 0.0
    %438 = vmatprep.subr.mxu0 0.0
    %439 = vmatpush1.xpose.msra.mxu0 0.0
    %440 = vmatprep.subr.mxu0 0.0
    %441 = vmatpush1.xpose.msra.mxu0 0.0
    %442 = vmatprep.subr.mxu0 0.0
    %443 = vmatpush1.xpose.msra.mxu0 0.0
    %444 = vmatprep.subr.mxu0 0.0
    %445 = vmatpush1.xpose.msra.mxu0 0.0
    %446 = vmatprep.subr.mxu0 0.0
    %447 = vmatpush1.xpose.msra.mxu0 0.0
    %448 = vmatprep.subr.mxu0 0.0
    %449 = vmatpush1.xpose.msra.mxu0 0.0
    %450 = vmatprep.subr.mxu0 0.0
    %451 = vmatpush1.xpose.msra.mxu0 0.0
    %452 = vmatprep.subr.mxu0 0.0
    %453 = vmatpush1.xpose.msra.mxu0 0.0
    %454 = vmatprep.subr.mxu0 0.0
    %455 = vmatpush1.xpose.msra.mxu0 0.0
    %456 = vmatprep.subr.mxu0 0.0
    %457 = vmatpush1.xpose.msra.mxu0 0.0
    %458 = vmatprep.subr.mxu0 0.0
    %459 = vmatpush1.xpose.msra.mxu0 0.0
    %460 = vmatprep.subr.mxu0 0.0
    %461 = vmatpush1.xpose.msra.mxu0 0.0
    %462 = vmatprep.subr.mxu0 0.0
    %463 = vmatpush1.xpose.msra.mxu0 0.0
    %464 = vmatprep.subr.mxu0 0.0
    %465 = vmatpush1.xpose.msra.mxu0 0.0
    %466 = vmatprep.mubr.f32.mxu0 0.0
    %467 = vmatmul.mubr.f32.gmra.mrb[0].mxu0 %v396
    %v468 = vpop.f32.mrb[0].mxu0
    %v469 = vadd.f32 0.0, %v468
    %v470 = vpop.f32.mrb[0].mxu0
    %471 = vdwg.mxu0
    %472 = vrot.lane.b32.xlu0 %v41, 120
    %v473 = vpop.permute.xlu0 %472
    %474 = vrot.lane.b32.xlu0 %v44, 112
    %v475 = vpop.permute.xlu0 %474
    %476 = vrot.lane.b32.xlu0 %v45, 112
    %v477 = vpop.permute.xlu0 %476
    %v478 = vsel %vm46, %v473, 0
    %v480 = vsel %vm46, %v475, 0
    %v482 = vsel %vm46, %v477, 0
    %484 = vmatprep.subr.mxu0 0.0
    %485 = vmatpush1.xpose.msra.mxu0 %v480
    %486 = vmatprep.subr.mxu0 0.0
    %487 = vmatpush1.xpose.msra.mxu0 %v482
    %488 = vmatprep.subr.mxu0 0.0
    %489 = vmatpush1.xpose.msra.mxu0 0.0
    %490 = vmatprep.subr.mxu0 0.0
    %491 = vmatpush1.xpose.msra.mxu0 0.0
    %492 = vmatprep.subr.mxu0 0.0
    %493 = vmatpush1.xpose.msra.mxu0 0.0
    %494 = vmatprep.subr.mxu0 0.0
    %495 = vmatpush1.xpose.msra.mxu0 0.0
    %496 = vmatprep.subr.mxu0 0.0
    %497 = vmatpush1.xpose.msra.mxu0 0.0
    %498 = vmatprep.subr.mxu0 0.0
    %499 = vmatpush1.xpose.msra.mxu0 0.0
    %500 = vmatprep.subr.mxu0 0.0
    %501 = vmatpush1.xpose.msra.mxu0 0.0
    %502 = vmatprep.subr.mxu0 0.0
    %503 = vmatpush1.xpose.msra.mxu0 0.0
    %504 = vmatprep.subr.mxu0 0.0
    %505 = vmatpush1.xpose.msra.mxu0 0.0
    %506 = vmatprep.subr.mxu0 0.0
    %507 = vmatpush1.xpose.msra.mxu0 0.0
    %508 = vmatprep.subr.mxu0 0.0
    %509 = vmatpush1.xpose.msra.mxu0 0.0
    %510 = vmatprep.subr.mxu0 0.0
    %511 = vmatpush1.xpose.msra.mxu0 0.0
    %512 = vmatprep.subr.mxu0 0.0
    %513 = vmatpush1.xpose.msra.mxu0 0.0
    %514 = vmatprep.subr.mxu0 0.0
    %515 = vmatpush1.xpose.msra.mxu0 0.0
    %516 = vmatprep.subr.mxu0 0.0
    %517 = vmatpush1.xpose.msra.mxu0 0.0
    %518 = vmatprep.subr.mxu0 0.0
    %519 = vmatpush1.xpose.msra.mxu0 0.0
    %520 = vmatprep.subr.mxu0 0.0
    %521 = vmatpush1.xpose.msra.mxu0 0.0
    %522 = vmatprep.subr.mxu0 0.0
    %523 = vmatpush1.xpose.msra.mxu0 0.0
    %524 = vmatprep.subr.mxu0 0.0
    %525 = vmatpush1.xpose.msra.mxu0 0.0
    %526 = vmatprep.subr.mxu0 0.0
    %527 = vmatpush1.xpose.msra.mxu0 0.0
    %528 = vmatprep.subr.mxu0 0.0
    %529 = vmatpush1.xpose.msra.mxu0 0.0
    %530 = vmatprep.subr.mxu0 0.0
    %531 = vmatpush1.xpose.msra.mxu0 0.0
    %532 = vmatprep.subr.mxu0 0.0
    %533 = vmatpush1.xpose.msra.mxu0 0.0
    %534 = vmatprep.subr.mxu0 0.0
    %535 = vmatpush1.xpose.msra.mxu0 0.0
    %536 = vmatprep.subr.mxu0 0.0
    %537 = vmatpush1.xpose.msra.mxu0 0.0
    %538 = vmatprep.subr.mxu0 0.0
    %539 = vmatpush1.xpose.msra.mxu0 0.0
    %540 = vmatprep.subr.mxu0 0.0
    %541 = vmatpush1.xpose.msra.mxu0 0.0
    %542 = vmatprep.subr.mxu0 0.0
    %543 = vmatpush1.xpose.msra.mxu0 0.0
    %544 = vmatprep.subr.mxu0 0.0
    %545 = vmatpush1.xpose.msra.mxu0 0.0
    %546 = vmatprep.subr.mxu0 0.0
    %547 = vmatpush1.xpose.msra.mxu0 0.0
    %548 = vmatprep.mubr.f32.mxu0 0.0
    %549 = vmatmul.mubr.f32.gmra.mrb[0].mxu0 %v478
    %v550 = vpop.f32.mrb[0].mxu0
    %v551 = vadd.f32 0.0, %v550
    %v552 = vpop.f32.mrb[0].mxu0
    %553 = vdwg.mxu0
    %v554 = vmul.f32 %v469, 0.35355338
    %v555 = vmul.f32 %v551, 0.35355338
    %v556 = vsel %vm207, %v554, -inf
    %557 = vmax.xlane.f32.xlu0 %v556
    %v558 = vpop.xlane.xlu0 %557
    %v559 = vsel %vm207, %v555, -inf
    %560 = vmax.xlane.f32.xlu0 %v559
    %v561 = vpop.xlane.xlu0 %560
    %v562 = vsub.f32 %v554, %v558
    %v563 = vsub.f32 %v555, %v561
    %v564 = vmul.f32 %v562, 1.442695
    %v565 = vpow.pop %v564
    %v566 = vmul.f32 %v563, 1.442695
    %v567 = vpow.pop %v566
    %v568 = vsel %vm207, %v565, 0.0
    %569 = vadd.xlane.f32.xlu0 %v568
    %v570 = vpop.xlane.xlu0 %569
    %v571 = vsel %vm207, %v567, 0.0
    %572 = vadd.xlane.f32.xlu0 %v571
    %v573 = vpop.xlane.xlu0 %572
    %v574 = vrcp.pop %v570
    %v575 = vrcp.pop %v573
    %v576 = vmul.f32 %v565, %v574
    %v577 = vmul.f32 %v567, %v575
    %578 = vrot.lane.b32.xlu0 %v42, 104
    %v579 = vpop.permute.xlu0 %578
    %580 = vrot.lane.b32.xlu0 %v43, 104
    %v581 = vpop.permute.xlu0 %580
    %v585 = vsel %vm207, %v576, 0
    %587 = vmatprep.subr.mxu0 0.0
    %588 = vmatpush1.msra.mxu0 %v579
    %589 = vmatprep.subr.mxu0 0.0
    %590 = vmatpush1.msra.mxu0 %v581
    %591 = vmatprep.subr.mxu0 0.0
    %592 = vmatpush1.msra.mxu0 0.0
    %593 = vmatprep.subr.mxu0 0.0
    %594 = vmatpush1.msra.mxu0 0.0
    %595 = vmatprep.subr.mxu0 0.0
    %596 = vmatpush1.msra.mxu0 0.0
    %597 = vmatprep.subr.mxu0 0.0
    %598 = vmatpush1.msra.mxu0 0.0
    %599 = vmatprep.subr.mxu0 0.0
    %600 = vmatpush1.msra.mxu0 0.0
    %601 = vmatprep.subr.mxu0 0.0
    %602 = vmatpush1.msra.mxu0 0.0
    %603 = vmatprep.subr.mxu0 0.0
    %604 = vmatpush1.msra.mxu0 0.0
    %605 = vmatprep.subr.mxu0 0.0
    %606 = vmatpush1.msra.mxu0 0.0
    %607 = vmatprep.subr.mxu0 0.0
    %608 = vmatpush1.msra.mxu0 0.0
    %609 = vmatprep.subr.mxu0 0.0
    %610 = vmatpush1.msra.mxu0 0.0
    %611 = vmatprep.subr.mxu0 0.0
    %612 = vmatpush1.msra.mxu0 0.0
    %613 = vmatprep.subr.mxu0 0.0
    %614 = vmatpush1.msra.mxu0 0.0
    %615 = vmatprep.subr.mxu0 0.0
    %616 = vmatpush1.msra.mxu0 0.0
    %617 = vmatprep.subr.mxu0 0.0
    %618 = vmatpush1.msra.mxu0 0.0
    %619 = vmatprep.subr.mxu0 0.0
    %620 = vmatpush1.msra.mxu0 0.0
    %621 = vmatprep.subr.mxu0 0.0
    %622 = vmatpush1.msra.mxu0 0.0
    %623 = vmatprep.subr.mxu0 0.0
    %624 = vmatpush1.msra.mxu0 0.0
    %625 = vmatprep.subr.mxu0 0.0
    %626 = vmatpush1.msra.mxu0 0.0
    %627 = vmatprep.subr.mxu0 0.0
    %628 = vmatpush1.msra.mxu0 0.0
    %629 = vmatprep.subr.mxu0 0.0
    %630 = vmatpush1.msra.mxu0 0.0
    %631 = vmatprep.subr.mxu0 0.0
    %632 = vmatpush1.msra.mxu0 0.0
    %633 = vmatprep.subr.mxu0 0.0
    %634 = vmatpush1.msra.mxu0 0.0
    %635 = vmatprep.subr.mxu0 0.0
    %636 = vmatpush1.msra.mxu0 0.0
    %637 = vmatprep.subr.mxu0 0.0
    %638 = vmatpush1.msra.mxu0 0.0
    %639 = vmatprep.subr.mxu0 0.0
    %640 = vmatpush1.msra.mxu0 0.0
    %641 = vmatprep.subr.mxu0 0.0
    %642 = vmatpush1.msra.mxu0 0.0
    %643 = vmatprep.subr.mxu0 0.0
    %644 = vmatpush1.msra.mxu0 0.0
    %645 = vmatprep.subr.mxu0 0.0
    %646 = vmatpush1.msra.mxu0 0.0
    %647 = vmatprep.subr.mxu0 0.0
    %648 = vmatpush1.msra.mxu0 0.0
    %649 = vmatprep.subr.mxu0 0.0
    %650 = vmatpush1.msra.mxu0 0.0
    %651 = vmatprep.mubr.f32.mxu0 0.0
    %652 = vmatmul.mubr.f32.gmra.mrb[0].mxu0 %v585
    %v653 = vpop.f32.mrb[0].mxu0
    %v654 = vadd.f32 0.0, %v653
    %v655 = vpop.f32.mrb[0].mxu0
    %656 = vdwg.mxu0
    %657 = vrot.lane.b32.xlu0 %v44, 104
    %v658 = vpop.permute.xlu0 %657
    %659 = vrot.lane.b32.xlu0 %v45, 104
    %v660 = vpop.permute.xlu0 %659
    %v664 = vsel %vm207, %v577, 0
    %666 = vmatprep.subr.mxu0 0.0
    %667 = vmatpush1.msra.mxu0 %v658
    %668 = vmatprep.subr.mxu0 0.0
    %669 = vmatpush1.msra.mxu0 %v660
    %670 = vmatprep.subr.mxu0 0.0
    %671 = vmatpush1.msra.mxu0 0.0
    %672 = vmatprep.subr.mxu0 0.0
    %673 = vmatpush1.msra.mxu0 0.0
    %674 = vmatprep.subr.mxu0 0.0
    %675 = vmatpush1.msra.mxu0 0.0
    %676 = vmatprep.subr.mxu0 0.0
    %677 = vmatpush1.msra.mxu0 0.0
    %678 = vmatprep.subr.mxu0 0.0
    %679 = vmatpush1.msra.mxu0 0.0
    %680 = vmatprep.subr.mxu0 0.0
    %681 = vmatpush1.msra.mxu0 0.0
    %682 = vmatprep.subr.mxu0 0.0
    %683 = vmatpush1.msra.mxu0 0.0
    %684 = vmatprep.subr.mxu0 0.0
    %685 = vmatpush1.msra.mxu0 0.0
    %686 = vmatprep.subr.mxu0 0.0
    %687 = vmatpush1.msra.mxu0 0.0
    %688 = vmatprep.subr.mxu0 0.0
    %689 = vmatpush1.msra.mxu0 0.0
    %690 = vmatprep.subr.mxu0 0.0
    %691 = vmatpush1.msra.mxu0 0.0
    %692 = vmatprep.subr.mxu0 0.0
    %693 = vmatpush1.msra.mxu0 0.0
    %694 = vmatprep.subr.mxu0 0.0
    %695 = vmatpush1.msra.mxu0 0.0
    %696 = vmatprep.subr.mxu0 0.0
    %697 = vmatpush1.msra.mxu0 0.0
    %698 = vmatprep.subr.mxu0 0.0
    %699 = vmatpush1.msra.mxu0 0.0
    %700 = vmatprep.subr.mxu0 0.0
    %701 = vmatpush1.msra.mxu0 0.0
    %702 = vmatprep.subr.mxu0 0.0
    %703 = vmatpush1.msra.mxu0 0.0
    %704 = vmatprep.subr.mxu0 0.0
    %705 = vmatpush1.msra.mxu0 0.0
    %706 = vmatprep.subr.mxu0 0.0
    %707 = vmatpush1.msra.mxu0 0.0
    %708 = vmatprep.subr.mxu0 0.0
    %709 = vmatpush1.msra.mxu0 0.0
    %710 = vmatprep.subr.mxu0 0.0
    %711 = vmatpush1.msra.mxu0 0.0
    %712 = vmatprep.subr.mxu0 0.0
    %713 = vmatpush1.msra.mxu0 0.0
    %714 = vmatprep.subr.mxu0 0.0
    %715 = vmatpush1.msra.mxu0 0.0
    %716 = vmatprep.subr.mxu0 0.0
    %717 = vmatpush1.msra.mxu0 0.0
    %718 = vmatprep.subr.mxu0 0.0
    %719 = vmatpush1.msra.mxu0 0.0
    %720 = vmatprep.subr.mxu0 0.0
    %721 = vmatpush1.msra.mxu0 0.0
    %722 = vmatprep.subr.mxu0 0.0
    %723 = vmatpush1.msra.mxu0 0.0
    %724 = vmatprep.subr.mxu0 0.0
    %725 = vmatpush1.msra.mxu0 0.0
    %726 = vmatprep.subr.mxu0 0.0
    %727 = vmatpush1.msra.mxu0 0.0
    %728 = vmatprep.subr.mxu0 0.0
    %729 = vmatpush1.msra.mxu0 0.0
    %730 = vmatprep.mubr.f32.mxu0 0.0
    %731 = vmatmul.mubr.f32.gmra.mrb[0].mxu0 %v664
    %v732 = vpop.f32.mrb[0].mxu0
    %v733 = vadd.f32 0.0, %v732
    %v734 = vpop.f32.mrb[0].mxu0
    %735 = vdwg.mxu0
    %738 = vrot.lane.b32.xlu0 %v654, 8
    %v739 = vpop.permute.xlu0 %738
    %740 = vrot.lane.b32.xlu0 %v733, 8
    %v741 = vpop.permute.xlu0 %740
    %vm744 = vcmask 130112
    %745 = vst.msk [vmem:[#allocation7] sm:$0xff] %vm744, %v739
    %746 = vst.msk [vmem:[#allocation7 + $0x8] sm:$0xff] %vm744, %v741
    %747 = vrot.lane.b32.xlu0 %v40, 112
    %v748 = vpop.permute.xlu0 %747
    %749 = vrot.lane.b32.xlu0 %v42, 96
    %v750 = vpop.permute.xlu0 %749
    %751 = vrot.lane.b32.xlu0 %v43, 96
    %v752 = vpop.permute.xlu0 %751
    %v753 = vsel %vm46, %v748, 0
    %v755 = vsel %vm46, %v750, 0
    %v757 = vsel %vm46, %v752, 0
    %759 = vmatprep.subr.mxu0 0.0
    %760 = vmatpush1.xpose.msra.mxu0 %v755
    %761 = vmatprep.subr.mxu0 0.0
    %762 = vmatpush1.xpose.msra.mxu0 %v757
    %763 = vmatprep.subr.mxu0 0.0
    %764 = vmatpush1.xpose.msra.mxu0 0.0
    %765 = vmatprep.subr.mxu0 0.0
    %766 = vmatpush1.xpose.msra.mxu0 0.0
    %767 = vmatprep.subr.mxu0 0.0
    %768 = vmatpush1.xpose.msra.mxu0 0.0
    %769 = vmatprep.subr.mxu0 0.0
    %770 = vmatpush1.xpose.msra.mxu0 0.0
    %771 = vmatprep.subr.mxu0 0.0
    %772 = vmatpush1.xpose.msra.mxu0 0.0
    %773 = vmatprep.subr.mxu0 0.0
    %774 = vmatpush1.xpose.msra.mxu0 0.0
    %775 = vmatprep.subr.mxu0 0.0
    %776 = vmatpush1.xpose.msra.mxu0 0.0
    %777 = vmatprep.subr.mxu0 0.0
    %778 = vmatpush1.xpose.msra.mxu0 0.0
    %779 = vmatprep.subr.mxu0 0.0
    %780 = vmatpush1.xpose.msra.mxu0 0.0
    %781 = vmatprep.subr.mxu0 0.0
    %782 = vmatpush1.xpose.msra.mxu0 0.0
    %783 = vmatprep.subr.mxu0 0.0
    %784 = vmatpush1.xpose.msra.mxu0 0.0
    %785 = vmatprep.subr.mxu0 0.0
    %786 = vmatpush1.xpose.msra.mxu0 0.0
    %787 = vmatprep.subr.mxu0 0.0
    %788 = vmatpush1.xpose.msra.mxu0 0.0
    %789 = vmatprep.subr.mxu0 0.0
    %790 = vmatpush1.xpose.msra.mxu0 0.0
    %791 = vmatprep.subr.mxu0 0.0
    %792 = vmatpush1.xpose.msra.mxu0 0.0
    %793 = vmatprep.subr.mxu0 0.0
    %794 = vmatpush1.xpose.msra.mxu0 0.0
    %795 = vmatprep.subr.mxu0 0.0
    %796 = vmatpush1.xpose.msra.mxu0 0.0
    %797 = vmatprep.subr.mxu0 0.0
    %798 = vmatpush1.xpose.msra.mxu0 0.0
    %799 = vmatprep.subr.mxu0 0.0
    %800 = vmatpush1.xpose.msra.mxu0 0.0
    %801 = vmatprep.subr.mxu0 0.0
    %802 = vmatpush1.xpose.msra.mxu0 0.0
    %803 = vmatprep.subr.mxu0 0.0
    %804 = vmatpush1.xpose.msra.mxu0 0.0
    %805 = vmatprep.subr.mxu0 0.0
    %806 = vmatpush1.xpose.msra.mxu0 0.0
    %807 = vmatprep.subr.mxu0 0.0
    %808 = vmatpush1.xpose.msra.mxu0 0.0
    %809 = vmatprep.subr.mxu0 0.0
    %810 = vmatpush1.xpose.msra.mxu0 0.0
    %811 = vmatprep.subr.mxu0 0.0
    %812 = vmatpush1.xpose.msra.mxu0 0.0
    %813 = vmatprep.subr.mxu0 0.0
    %814 = vmatpush1.xpose.msra.mxu0 0.0
    %815 = vmatprep.subr.mxu0 0.0
    %816 = vmatpush1.xpose.msra.mxu0 0.0
    %817 = vmatprep.subr.mxu0 0.0
    %818 = vmatpush1.xpose.msra.mxu0 0.0
    %819 = vmatprep.subr.mxu0 0.0
    %820 = vmatpush1.xpose.msra.mxu0 0.0
    %821 = vmatprep.subr.mxu0 0.0
    %822 = vmatpush1.xpose.msra.mxu0 0.0
    %823 = vmatprep.mubr.f32.mxu0 0.0
    %824 = vmatmul.mubr.f32.gmra.mrb[0].mxu0 %v753
    %v825 = vpop.f32.mrb[0].mxu0
    %v826 = vadd.f32 0.0, %v825
    %v827 = vpop.f32.mrb[0].mxu0
    %828 = vdwg.mxu0
    %829 = vrot.lane.b32.xlu0 %v41, 112
    %v830 = vpop.permute.xlu0 %829
    %831 = vrot.lane.b32.xlu0 %v44, 96
    %v832 = vpop.permute.xlu0 %831
    %833 = vrot.lane.b32.xlu0 %v45, 96
    %v834 = vpop.permute.xlu0 %833
    %v835 = vsel %vm46, %v830, 0
    %v837 = vsel %vm46, %v832, 0
    %v839 = vsel %vm46, %v834, 0
    %841 = vmatprep.subr.mxu0 0.0
    %842 = vmatpush1.xpose.msra.mxu0 %v837
    %843 = vmatprep.subr.mxu0 0.0
    %844 = vmatpush1.xpose.msra.mxu0 %v839
    %845 = vmatprep.subr.mxu0 0.0
    %846 = vmatpush1.xpose.msra.mxu0 0.0
    %847 = vmatprep.subr.mxu0 0.0
    %848 = vmatpush1.xpose.msra.mxu0 0.0
    %849 = vmatprep.subr.mxu0 0.0
    %850 = vmatpush1.xpose.msra.mxu0 0.0
    %851 = vmatprep.subr.mxu0 0.0
    %852 = vmatpush1.xpose.msra.mxu0 0.0
    %853 = vmatprep.subr.mxu0 0.0
    %854 = vmatpush1.xpose.msra.mxu0 0.0
    %855 = vmatprep.subr.mxu0 0.0
    %856 = vmatpush1.xpose.msra.mxu0 0.0
    %857 = vmatprep.subr.mxu0 0.0
    %858 = vmatpush1.xpose.msra.mxu0 0.0
    %859 = vmatprep.subr.mxu0 0.0
    %860 = vmatpush1.xpose.msra.mxu0 0.0
    %861 = vmatprep.subr.mxu0 0.0
    %862 = vmatpush1.xpose.msra.mxu0 0.0
    %863 = vmatprep.subr.mxu0 0.0
    %864 = vmatpush1.xpose.msra.mxu0 0.0
    %865 = vmatprep.subr.mxu0 0.0
    %866 = vmatpush1.xpose.msra.mxu0 0.0
    %867 = vmatprep.subr.mxu0 0.0
    %868 = vmatpush1.xpose.msra.mxu0 0.0
    %869 = vmatprep.subr.mxu0 0.0
    %870 = vmatpush1.xpose.msra.mxu0 0.0
    %871 = vmatprep.subr.mxu0 0.0
    %872 = vmatpush1.xpose.msra.mxu0 0.0
    %873 = vmatprep.subr.mxu0 0.0
    %874 = vmatpush1.xpose.msra.mxu0 0.0
    %875 = vmatprep.subr.mxu0 0.0
    %876 = vmatpush1.xpose.msra.mxu0 0.0
    %877 = vmatprep.subr.mxu0 0.0
    %878 = vmatpush1.xpose.msra.mxu0 0.0
    %879 = vmatprep.subr.mxu0 0.0
    %880 = vmatpush1.xpose.msra.mxu0 0.0
    %881 = vmatprep.subr.mxu0 0.0
    %882 = vmatpush1.xpose.msra.mxu0 0.0
    %883 = vmatprep.subr.mxu0 0.0
    %884 = vmatpush1.xpose.msra.mxu0 0.0
    %885 = vmatprep.subr.mxu0 0.0
    %886 = vmatpush1.xpose.msra.mxu0 0.0
    %887 = vmatprep.subr.mxu0 0.0
    %888 = vmatpush1.xpose.msra.mxu0 0.0
    %889 = vmatprep.subr.mxu0 0.0
    %890 = vmatpush1.xpose.msra.mxu0 0.0
    %891 = vmatprep.subr.mxu0 0.0
    %892 = vmatpush1.xpose.msra.mxu0 0.0
    %893 = vmatprep.subr.mxu0 0.0
    %894 = vmatpush1.xpose.msra.mxu0 0.0
    %895 = vmatprep.subr.mxu0 0.0
    %896 = vmatpush1.xpose.msra.mxu0 0.0
    %897 = vmatprep.subr.mxu0 0.0
    %898 = vmatpush1.xpose.msra.mxu0 0.0
    %899 = vmatprep.subr.mxu0 0.0
    %900 = vmatpush1.xpose.msra.mxu0 0.0
    %901 = vmatprep.subr.mxu0 0.0
    %902 = vmatpush1.xpose.msra.mxu0 0.0
    %903 = vmatprep.subr.mxu0 0.0
    %904 = vmatpush1.xpose.msra.mxu0 0.0
    %905 = vmatprep.mubr.f32.mxu0 0.0
    %906 = vmatmul.mubr.f32.gmra.mrb[0].mxu0 %v835
    %v907 = vpop.f32.mrb[0].mxu0
    %v908 = vadd.f32 0.0, %v907
    %v909 = vpop.f32.mrb[0].mxu0
    %910 = vdwg.mxu0
    %v911 = vmul.f32 %v826, 0.35355338
    %v912 = vmul.f32 %v908, 0.35355338
    %v913 = vsel %vm207, %v911, -inf
    %914 = vmax.xlane.f32.xlu0 %v913
    %v915 = vpop.xlane.xlu0 %914
    %v916 = vsel %vm207, %v912, -inf
    %917 = vmax.xlane.f32.xlu0 %v916
    %v918 = vpop.xlane.xlu0 %917
    %v919 = vsub.f32 %v911, %v915
    %v920 = vsub.f32 %v912, %v918
    %v921 = vmul.f32 %v919, 1.442695
    %v922 = vpow.pop %v921
    %v923 = vmul.f32 %v920, 1.442695
    %v924 = vpow.pop %v923
    %v925 = vsel %vm207, %v922, 0.0
    %926 = vadd.xlane.f32.xlu0 %v925
    %v927 = vpop.xlane.xlu0 %926
    %v928 = vsel %vm207, %v924, 0.0
    %929 = vadd.xlane.f32.xlu0 %v928
    %v930 = vpop.xlane.xlu0 %929
    %v931 = vrcp.pop %v927
    %v932 = vrcp.pop %v930
    %v933 = vmul.f32 %v922, %v931
    %v934 = vmul.f32 %v924, %v932
    %935 = vrot.lane.b32.xlu0 %v42, 88
    %v936 = vpop.permute.xlu0 %935
    %937 = vrot.lane.b32.xlu0 %v43, 88
    %v938 = vpop.permute.xlu0 %937
    %v942 = vsel %vm207, %v933, 0
    %944 = vmatprep.subr.mxu0 0.0
    %945 = vmatpush1.msra.mxu0 %v936
    %946 = vmatprep.subr.mxu0 0.0
    %947 = vmatpush1.msra.mxu0 %v938
    %948 = vmatprep.subr.mxu0 0.0
    %949 = vmatpush1.msra.mxu0 0.0
    %950 = vmatprep.subr.mxu0 0.0
    %951 = vmatpush1.msra.mxu0 0.0
    %952 = vmatprep.subr.mxu0 0.0
    %953 = vmatpush1.msra.mxu0 0.0
    %954 = vmatprep.subr.mxu0 0.0
    %955 = vmatpush1.msra.mxu0 0.0
    %956 = vmatprep.subr.mxu0 0.0
    %957 = vmatpush1.msra.mxu0 0.0
    %958 = vmatprep.subr.mxu0 0.0
    %959 = vmatpush1.msra.mxu0 0.0
    %960 = vmatprep.subr.mxu0 0.0
    %961 = vmatpush1.msra.mxu0 0.0
    %962 = vmatprep.subr.mxu0 0.0
    %963 = vmatpush1.msra.mxu0 0.0
    %964 = vmatprep.subr.mxu0 0.0
    %965 = vmatpush1.msra.mxu0 0.0
    %966 = vmatprep.subr.mxu0 0.0
    %967 = vmatpush1.msra.mxu0 0.0
    %968 = vmatprep.subr.mxu0 0.0
    %969 = vmatpush1.msra.mxu0 0.0
    %970 = vmatprep.subr.mxu0 0.0
    %971 = vmatpush1.msra.mxu0 0.0
    %972 = vmatprep.subr.mxu0 0.0
    %973 = vmatpush1.msra.mxu0 0.0
    %974 = vmatprep.subr.mxu0 0.0
    %975 = vmatpush1.msra.mxu0 0.0
    %976 = vmatprep.subr.mxu0 0.0
    %977 = vmatpush1.msra.mxu0 0.0
    %978 = vmatprep.subr.mxu0 0.0
    %979 = vmatpush1.msra.mxu0 0.0
    %980 = vmatprep.subr.mxu0 0.0
    %981 = vmatpush1.msra.mxu0 0.0
    %982 = vmatprep.subr.mxu0 0.0
    %983 = vmatpush1.msra.mxu0 0.0
    %984 = vmatprep.subr.mxu0 0.0
    %985 = vmatpush1.msra.mxu0 0.0
    %986 = vmatprep.subr.mxu0 0.0
    %987 = vmatpush1.msra.mxu0 0.0
    %988 = vmatprep.subr.mxu0 0.0
    %989 = vmatpush1.msra.mxu0 0.0
    %990 = vmatprep.subr.mxu0 0.0
    %991 = vmatpush1.msra.mxu0 0.0
    %992 = vmatprep.subr.mxu0 0.0
    %993 = vmatpush1.msra.mxu0 0.0
    %994 = vmatprep.subr.mxu0 0.0
    %995 = vmatpush1.msra.mxu0 0.0
    %996 = vmatprep.subr.mxu0 0.0
    %997 = vmatpush1.msra.mxu0 0.0
    %998 = vmatprep.subr.mxu0 0.0
    %999 = vmatpush1.msra.mxu0 0.0
    %1000 = vmatprep.subr.mxu0 0.0
    %1001 = vmatpush1.msra.mxu0 0.0
    %1002 = vmatprep.subr.mxu0 0.0
    %1003 = vmatpush1.msra.mxu0 0.0
    %1004 = vmatprep.subr.mxu0 0.0
    %1005 = vmatpush1.msra.mxu0 0.0
    %1006 = vmatprep.subr.mxu0 0.0
    %1007 = vmatpush1.msra.mxu0 0.0
    %1008 = vmatprep.mubr.f32.mxu0 0.0
    %1009 = vmatmul.mubr.f32.gmra.mrb[0].mxu0 %v942
    %v1010 = vpop.f32.mrb[0].mxu0
    %v1011 = vadd.f32 0.0, %v1010
    %v1012 = vpop.f32.mrb[0].mxu0
    %1013 = vdwg.mxu0
    %1014 = vrot.lane.b32.xlu0 %v44, 88
    %v1015 = vpop.permute.xlu0 %1014
    %1016 = vrot.lane.b32.xlu0 %v45, 88
    %v1017 = vpop.permute.xlu0 %1016
    %v1021 = vsel %vm207, %v934, 0
    %1023 = vmatprep.subr.mxu0 0.0
    %1024 = vmatpush1.msra.mxu0 %v1015
    %1025 = vmatprep.subr.mxu0 0.0
    %1026 = vmatpush1.msra.mxu0 %v1017
    %1027 = vmatprep.subr.mxu0 0.0
    %1028 = vmatpush1.msra.mxu0 0.0
    %1029 = vmatprep.subr.mxu0 0.0
    %1030 = vmatpush1.msra.mxu0 0.0
    %1031 = vmatprep.subr.mxu0 0.0
    %1032 = vmatpush1.msra.mxu0 0.0
    %1033 = vmatprep.subr.mxu0 0.0
    %1034 = vmatpush1.msra.mxu0 0.0
    %1035 = vmatprep.subr.mxu0 0.0
    %1036 = vmatpush1.msra.mxu0 0.0
    %1037 = vmatprep.subr.mxu0 0.0
    %1038 = vmatpush1.msra.mxu0 0.0
    %1039 = vmatprep.subr.mxu0 0.0
    %1040 = vmatpush1.msra.mxu0 0.0
    %1041 = vmatprep.subr.mxu0 0.0
    %1042 = vmatpush1.msra.mxu0 0.0
    %1043 = vmatprep.subr.mxu0 0.0
    %1044 = vmatpush1.msra.mxu0 0.0
    %1045 = vmatprep.subr.mxu0 0.0
    %1046 = vmatpush1.msra.mxu0 0.0
    %1047 = vmatprep.subr.mxu0 0.0
    %1048 = vmatpush1.msra.mxu0 0.0
    %1049 = vmatprep.subr.mxu0 0.0
    %1050 = vmatpush1.msra.mxu0 0.0
    %1051 = vmatprep.subr.mxu0 0.0
    %1052 = vmatpush1.msra.mxu0 0.0
    %1053 = vmatprep.subr.mxu0 0.0
    %1054 = vmatpush1.msra.mxu0 0.0
    %1055 = vmatprep.subr.mxu0 0.0
    %1056 = vmatpush1.msra.mxu0 0.0
    %1057 = vmatprep.subr.mxu0 0.0
    %1058 = vmatpush1.msra.mxu0 0.0
    %1059 = vmatprep.subr.mxu0 0.0
    %1060 = vmatpush1.msra.mxu0 0.0
    %1061 = vmatprep.subr.mxu0 0.0
    %1062 = vmatpush1.msra.mxu0 0.0
    %1063 = vmatprep.subr.mxu0 0.0
    %1064 = vmatpush1.msra.mxu0 0.0
    %1065 = vmatprep.subr.mxu0 0.0
    %1066 = vmatpush1.msra.mxu0 0.0
    %1067 = vmatprep.subr.mxu0 0.0
    %1068 = vmatpush1.msra.mxu0 0.0
    %1069 = vmatprep.subr.mxu0 0.0
    %1070 = vmatpush1.msra.mxu0 0.0
    %1071 = vmatprep.subr.mxu0 0.0
    %1072 = vmatpush1.msra.mxu0 0.0
    %1073 = vmatprep.subr.mxu0 0.0
    %1074 = vmatpush1.msra.mxu0 0.0
    %1075 = vmatprep.subr.mxu0 0.0
    %1076 = vmatpush1.msra.mxu0 0.0
    %1077 = vmatprep.subr.mxu0 0.0
    %1078 = vmatpush1.msra.mxu0 0.0
    %1079 = vmatprep.subr.mxu0 0.0
    %1080 = vmatpush1.msra.mxu0 0.0
    %1081 = vmatprep.subr.mxu0 0.0
    %1082 = vmatpush1.msra.mxu0 0.0
    %1083 = vmatprep.subr.mxu0 0.0
    %1084 = vmatpush1.msra.mxu0 0.0
    %1085 = vmatprep.subr.mxu0 0.0
    %1086 = vmatpush1.msra.mxu0 0.0
    %1087 = vmatprep.mubr.f32.mxu0 0.0
    %1088 = vmatmul.mubr.f32.gmra.mrb[0].mxu0 %v1021
    %v1089 = vpop.f32.mrb[0].mxu0
    %v1090 = vadd.f32 0.0, %v1089
    %v1091 = vpop.f32.mrb[0].mxu0
    %1092 = vdwg.mxu0
    %1095 = vrot.lane.b32.xlu0 %v1011, 16
    %v1096 = vpop.permute.xlu0 %1095
    %1097 = vrot.lane.b32.xlu0 %v1090, 16
    %v1098 = vpop.permute.xlu0 %1097
    %vm1101 = vcmask 195712
    %1102 = vst.msk [vmem:[#allocation7] sm:$0xff] %vm1101, %v1096
    %1103 = vst.msk [vmem:[#allocation7 + $0x8] sm:$0xff] %vm1101, %v1098
    %1104 = vrot.lane.b32.xlu0 %v40, 104
    %v1105 = vpop.permute.xlu0 %1104
    %1106 = vrot.lane.b32.xlu0 %v42, 80
    %v1107 = vpop.permute.xlu0 %1106
    %1108 = vrot.lane.b32.xlu0 %v43, 80
    %v1109 = vpop.permute.xlu0 %1108
    %v1110 = vsel %vm46, %v1105, 0
    %v1112 = vsel %vm46, %v1107, 0
    %v1114 = vsel %vm46, %v1109, 0
    %1116 = vmatprep.subr.mxu0 0.0
    %1117 = vmatpush1.xpose.msra.mxu0 %v1112
    %1118 = vmatprep.subr.mxu0 0.0
    %1119 = vmatpush1.xpose.msra.mxu0 %v1114
    %1120 = vmatprep.subr.mxu0 0.0
    %1121 = vmatpush1.xpose.msra.mxu0 0.0
    %1122 = vmatprep.subr.mxu0 0.0
    %1123 = vmatpush1.xpose.msra.mxu0 0.0
    %1124 = vmatprep.subr.mxu0 0.0
    %1125 = vmatpush1.xpose.msra.mxu0 0.0
    %1126 = vmatprep.subr.mxu0 0.0
    %1127 = vmatpush1.xpose.msra.mxu0 0.0
    %1128 = vmatprep.subr.mxu0 0.0
    %1129 = vmatpush1.xpose.msra.mxu0 0.0
    %1130 = vmatprep.subr.mxu0 0.0
    %1131 = vmatpush1.xpose.msra.mxu0 0.0
    %1132 = vmatprep.subr.mxu0 0.0
    %1133 = vmatpush1.xpose.msra.mxu0 0.0
    %1134 = vmatprep.subr.mxu0 0.0
    %1135 = vmatpush1.xpose.msra.mxu0 0.0
    %1136 = vmatprep.subr.mxu0 0.0
    %1137 = vmatpush1.xpose.msra.mxu0 0.0
    %1138 = vmatprep.subr.mxu0 0.0
    %1139 = vmatpush1.xpose.msra.mxu0 0.0
    %1140 = vmatprep.subr.mxu0 0.0
    %1141 = vmatpush1.xpose.msra.mxu0 0.0
    %1142 = vmatprep.subr.mxu0 0.0
    %1143 = vmatpush1.xpose.msra.mxu0 0.0
    %1144 = vmatprep.subr.mxu0 0.0
    %1145 = vmatpush1.xpose.msra.mxu0 0.0
    %1146 = vmatprep.subr.mxu0 0.0
    %1147 = vmatpush1.xpose.msra.mxu0 0.0
    %1148 = vmatprep.subr.mxu0 0.0
    %1149 = vmatpush1.xpose.msra.mxu0 0.0
    %1150 = vmatprep.subr.mxu0 0.0
    %1151 = vmatpush1.xpose.msra.mxu0 0.0
    %1152 = vmatprep.subr.mxu0 0.0
    %1153 = vmatpush1.xpose.msra.mxu0 0.0
    %1154 = vmatprep.subr.mxu0 0.0
    %1155 = vmatpush1.xpose.msra.mxu0 0.0
    %1156 = vmatprep.subr.mxu0 0.0
    %1157 = vmatpush1.xpose.msra.mxu0 0.0
    %1158 = vmatprep.subr.mxu0 0.0
    %1159 = vmatpush1.xpose.msra.mxu0 0.0
    %1160 = vmatprep.subr.mxu0 0.0
    %1161 = vmatpush1.xpose.msra.mxu0 0.0
    %1162 = vmatprep.subr.mxu0 0.0
    %1163 = vmatpush1.xpose.msra.mxu0 0.0
    %1164 = vmatprep.subr.mxu0 0.0
    %1165 = vmatpush1.xpose.msra.mxu0 0.0
    %1166 = vmatprep.subr.mxu0 0.0
    %1167 = vmatpush1.xpose.msra.mxu0 0.0
    %1168 = vmatprep.subr.mxu0 0.0
    %1169 = vmatpush1.xpose.msra.mxu0 0.0
    %1170 = vmatprep.subr.mxu0 0.0
    %1171 = vmatpush1.xpose.msra.mxu0 0.0
    %1172 = vmatprep.subr.mxu0 0.0
    %1173 = vmatpush1.xpose.msra.mxu0 0.0
    %1174 = vmatprep.subr.mxu0 0.0
    %1175 = vmatpush1.xpose.msra.mxu0 0.0
    %1176 = vmatprep.subr.mxu0 0.0
    %1177 = vmatpush1.xpose.msra.mxu0 0.0
    %1178 = vmatprep.subr.mxu0 0.0
    %1179 = vmatpush1.xpose.msra.mxu0 0.0
    %1180 = vmatprep.mubr.f32.mxu0 0.0
    %1181 = vmatmul.mubr.f32.gmra.mrb[0].mxu0 %v1110
    %v1182 = vpop.f32.mrb[0].mxu0
    %v1183 = vadd.f32 0.0, %v1182
    %v1184 = vpop.f32.mrb[0].mxu0
    %1185 = vdwg.mxu0
    %1186 = vrot.lane.b32.xlu0 %v41, 104
    %v1187 = vpop.permute.xlu0 %1186
    %1188 = vrot.lane.b32.xlu0 %v44, 80
    %v1189 = vpop.permute.xlu0 %1188
    %1190 = vrot.lane.b32.xlu0 %v45, 80
    %v1191 = vpop.permute.xlu0 %1190
    %v1192 = vsel %vm46, %v1187, 0
    %v1194 = vsel %vm46, %v1189, 0
    %v1196 = vsel %vm46, %v1191, 0
    %1198 = vmatprep.subr.mxu0 0.0
    %1199 = vmatpush1.xpose.msra.mxu0 %v1194
    %1200 = vmatprep.subr.mxu0 0.0
    %1201 = vmatpush1.xpose.msra.mxu0 %v1196
    %1202 = vmatprep.subr.mxu0 0.0
    %1203 = vmatpush1.xpose.msra.mxu0 0.0
    %1204 = vmatprep.subr.mxu0 0.0
    %1205 = vmatpush1.xpose.msra.mxu0 0.0
    %1206 = vmatprep.subr.mxu0 0.0
    %1207 = vmatpush1.xpose.msra.mxu0 0.0
    %1208 = vmatprep.subr.mxu0 0.0
    %1209 = vmatpush1.xpose.msra.mxu0 0.0
    %1210 = vmatprep.subr.mxu0 0.0
    %1211 = vmatpush1.xpose.msra.mxu0 0.0
    %1212 = vmatprep.subr.mxu0 0.0
    %1213 = vmatpush1.xpose.msra.mxu0 0.0
    %1214 = vmatprep.subr.mxu0 0.0
    %1215 = vmatpush1.xpose.msra.mxu0 0.0
    %1216 = vmatprep.subr.mxu0 0.0
    %1217 = vmatpush1.xpose.msra.mxu0 0.0
    %1218 = vmatprep.subr.mxu0 0.0
    %1219 = vmatpush1.xpose.msra.mxu0 0.0
    %1220 = vmatprep.subr.mxu0 0.0
    %1221 = vmatpush1.xpose.msra.mxu0 0.0
    %1222 = vmatprep.subr.mxu0 0.0
    %1223 = vmatpush1.xpose.msra.mxu0 0.0
    %1224 = vmatprep.subr.mxu0 0.0
    %1225 = vmatpush1.xpose.msra.mxu0 0.0
    %1226 = vmatprep.subr.mxu0 0.0
    %1227 = vmatpush1.xpose.msra.mxu0 0.0
    %1228 = vmatprep.subr.mxu0 0.0
    %1229 = vmatpush1.xpose.msra.mxu0 0.0
    %1230 = vmatprep.subr.mxu0 0.0
    %1231 = vmatpush1.xpose.msra.mxu0 0.0
    %1232 = vmatprep.subr.mxu0 0.0
    %1233 = vmatpush1.xpose.msra.mxu0 0.0
    %1234 = vmatprep.subr.mxu0 0.0
    %1235 = vmatpush1.xpose.msra.mxu0 0.0
    %1236 = vmatprep.subr.mxu0 0.0
    %1237 = vmatpush1.xpose.msra.mxu0 0.0
    %1238 = vmatprep.subr.mxu0 0.0
    %1239 = vmatpush1.xpose.msra.mxu0 0.0
    %1240 = vmatprep.subr.mxu0 0.0
    %1241 = vmatpush1.xpose.msra.mxu0 0.0
    %1242 = vmatprep.subr.mxu0 0.0
    %1243 = vmatpush1.xpose.msra.mxu0 0.0
    %1244 = vmatprep.subr.mxu0 0.0
    %1245 = vmatpush1.xpose.msra.mxu0 0.0
    %1246 = vmatprep.subr.mxu0 0.0
    %1247 = vmatpush1.xpose.msra.mxu0 0.0
    %1248 = vmatprep.subr.mxu0 0.0
    %1249 = vmatpush1.xpose.msra.mxu0 0.0
    %1250 = vmatprep.subr.mxu0 0.0
    %1251 = vmatpush1.xpose.msra.mxu0 0.0
    %1252 = vmatprep.subr.mxu0 0.0
    %1253 = vmatpush1.xpose.msra.mxu0 0.0
    %1254 = vmatprep.subr.mxu0 0.0
    %1255 = vmatpush1.xpose.msra.mxu0 0.0
    %1256 = vmatprep.subr.mxu0 0.0
    %1257 = vmatpush1.xpose.msra.mxu0 0.0
    %1258 = vmatprep.subr.mxu0 0.0
    %1259 = vmatpush1.xpose.msra.mxu0 0.0
    %1260 = vmatprep.subr.mxu0 0.0
    %1261 = vmatpush1.xpose.msra.mxu0 0.0
    %1262 = vmatprep.mubr.f32.mxu0 0.0
    %1263 = vmatmul.mubr.f32.gmra.mrb[0].mxu0 %v1192
    %v1264 = vpop.f32.mrb[0].mxu0
    %v1265 = vadd.f32 0.0, %v1264
    %v1266 = vpop.f32.mrb[0].mxu0
    %1267 = vdwg.mxu0
    %v1268 = vmul.f32 %v1183, 0.35355338
    %v1269 = vmul.f32 %v1265, 0.35355338
    %v1270 = vsel %vm207, %v1268, -inf
    %1271 = vmax.xlane.f32.xlu0 %v1270
    %v1272 = vpop.xlane.xlu0 %1271
    %v1273 = vsel %vm207, %v1269, -inf
    %1274 = vmax.xlane.f32.xlu0 %v1273
    %v1275 = vpop.xlane.xlu0 %1274
    %v1276 = vsub.f32 %v1268, %v1272
    %v1277 = vsub.f32 %v1269, %v1275
    %v1278 = vmul.f32 %v1276, 1.442695
    %v1279 = vpow.pop %v1278
    %v1280 = vmul.f32 %v1277, 1.442695
    %v1281 = vpow.pop %v1280
    %v1282 = vsel %vm207, %v1279, 0.0
    %1283 = vadd.xlane.f32.xlu0 %v1282
    %v1284 = vpop.xlane.xlu0 %1283
    %v1285 = vsel %vm207, %v1281, 0.0
    %1286 = vadd.xlane.f32.xlu0 %v1285
    %v1287 = vpop.xlane.xlu0 %1286
    %v1288 = vrcp.pop %v1284
    %v1289 = vrcp.pop %v1287
    %v1290 = vmul.f32 %v1279, %v1288
    %v1291 = vmul.f32 %v1281, %v1289
    %1292 = vrot.lane.b32.xlu0 %v42, 72
    %v1293 = vpop.permute.xlu0 %1292
    %1294 = vrot.lane.b32.xlu0 %v43, 72
    %v1295 = vpop.permute.xlu0 %1294
    %v1299 = vsel %vm207, %v1290, 0
    %1301 = vmatprep.subr.mxu0 0.0
    %1302 = vmatpush1.msra.mxu0 %v1293
    %1303 = vmatprep.subr.mxu0 0.0
    %1304 = vmatpush1.msra.mxu0 %v1295
    %1305 = vmatprep.subr.mxu0 0.0
    %1306 = vmatpush1.msra.mxu0 0.0
    %1307 = vmatprep.subr.mxu0 0.0
    %1308 = vmatpush1.msra.mxu0 0.0
    %1309 = vmatprep.subr.mxu0 0.0
    %1310 = vmatpush1.msra.mxu0 0.0
    %1311 = vmatprep.subr.mxu0 0.0
    %1312 = vmatpush1.msra.mxu0 0.0
    %1313 = vmatprep.subr.mxu0 0.0
    %1314 = vmatpush1.msra.mxu0 0.0
    %1315 = vmatprep.subr.mxu0 0.0
    %1316 = vmatpush1.msra.mxu0 0.0
    %1317 = vmatprep.subr.mxu0 0.0
    %1318 = vmatpush1.msra.mxu0 0.0
    %1319 = vmatprep.subr.mxu0 0.0
    %1320 = vmatpush1.msra.mxu0 0.0
    %1321 = vmatprep.subr.mxu0 0.0
    %1322 = vmatpush1.msra.mxu0 0.0
    %1323 = vmatprep.subr.mxu0 0.0
    %1324 = vmatpush1.msra.mxu0 0.0
    %1325 = vmatprep.subr.mxu0 0.0
    %1326 = vmatpush1.msra.mxu0 0.0
    %1327 = vmatprep.subr.mxu0 0.0
    %1328 = vmatpush1.msra.mxu0 0.0
    %1329 = vmatprep.subr.mxu0 0.0
    %1330 = vmatpush1.msra.mxu0 0.0
    %1331 = vmatprep.subr.mxu0 0.0
    %1332 = vmatpush1.msra.mxu0 0.0
    %1333 = vmatprep.subr.mxu0 0.0
    %1334 = vmatpush1.msra.mxu0 0.0
    %1335 = vmatprep.subr.mxu0 0.0
    %1336 = vmatpush1.msra.mxu0 0.0
    %1337 = vmatprep.subr.mxu0 0.0
    %1338 = vmatpush1.msra.mxu0 0.0
    %1339 = vmatprep.subr.mxu0 0.0
    %1340 = vmatpush1.msra.mxu0 0.0
    %1341 = vmatprep.subr.mxu0 0.0
    %1342 = vmatpush1.msra.mxu0 0.0
    %1343 = vmatprep.subr.mxu0 0.0
    %1344 = vmatpush1.msra.mxu0 0.0
    %1345 = vmatprep.subr.mxu0 0.0
    %1346 = vmatpush1.msra.mxu0 0.0
    %1347 = vmatprep.subr.mxu0 0.0
    %1348 = vmatpush1.msra.mxu0 0.0
    %1349 = vmatprep.subr.mxu0 0.0
    %1350 = vmatpush1.msra.mxu0 0.0
    %1351 = vmatprep.subr.mxu0 0.0
    %1352 = vmatpush1.msra.mxu0 0.0
    %1353 = vmatprep.subr.mxu0 0.0
    %1354 = vmatpush1.msra.mxu0 0.0
    %1355 = vmatprep.subr.mxu0 0.0
    %1356 = vmatpush1.msra.mxu0 0.0
    %1357 = vmatprep.subr.mxu0 0.0
    %1358 = vmatpush1.msra.mxu0 0.0
    %1359 = vmatprep.subr.mxu0 0.0
    %1360 = vmatpush1.msra.mxu0 0.0
    %1361 = vmatprep.subr.mxu0 0.0
    %1362 = vmatpush1.msra.mxu0 0.0
    %1363 = vmatprep.subr.mxu0 0.0
    %1364 = vmatpush1.msra.mxu0 0.0
    %1365 = vmatprep.mubr.f32.mxu0 0.0
    %1366 = vmatmul.mubr.f32.gmra.mrb[0].mxu0 %v1299
    %v1367 = vpop.f32.mrb[0].mxu0
    %v1368 = vadd.f32 0.0, %v1367
    %v1369 = vpop.f32.mrb[0].mxu0
    %1370 = vdwg.mxu0
    %1371 = vrot.lane.b32.xlu0 %v44, 72
    %v1372 = vpop.permute.xlu0 %1371
    %1373 = vrot.lane.b32.xlu0 %v45, 72
    %v1374 = vpop.permute.xlu0 %1373
    %v1378 = vsel %vm207, %v1291, 0
    %1380 = vmatprep.subr.mxu0 0.0
    %1381 = vmatpush1.msra.mxu0 %v1372
    %1382 = vmatprep.subr.mxu0 0.0
    %1383 = vmatpush1.msra.mxu0 %v1374
    %1384 = vmatprep.subr.mxu0 0.0
    %1385 = vmatpush1.msra.mxu0 0.0
    %1386 = vmatprep.subr.mxu0 0.0
    %1387 = vmatpush1.msra.mxu0 0.0
    %1388 = vmatprep.subr.mxu0 0.0
    %1389 = vmatpush1.msra.mxu0 0.0
    %1390 = vmatprep.subr.mxu0 0.0
    %1391 = vmatpush1.msra.mxu0 0.0
    %1392 = vmatprep.subr.mxu0 0.0
    %1393 = vmatpush1.msra.mxu0 0.0
    %1394 = vmatprep.subr.mxu0 0.0
    %1395 = vmatpush1.msra.mxu0 0.0
    %1396 = vmatprep.subr.mxu0 0.0
    %1397 = vmatpush1.msra.mxu0 0.0
    %1398 = vmatprep.subr.mxu0 0.0
    %1399 = vmatpush1.msra.mxu0 0.0
    %1400 = vmatprep.subr.mxu0 0.0
    %1401 = vmatpush1.msra.mxu0 0.0
    %1402 = vmatprep.subr.mxu0 0.0
    %1403 = vmatpush1.msra.mxu0 0.0
    %1404 = vmatprep.subr.mxu0 0.0
    %1405 = vmatpush1.msra.mxu0 0.0
    %1406 = vmatprep.subr.mxu0 0.0
    %1407 = vmatpush1.msra.mxu0 0.0
    %1408 = vmatprep.subr.mxu0 0.0
    %1409 = vmatpush1.msra.mxu0 0.0
    %1410 = vmatprep.subr.mxu0 0.0
    %1411 = vmatpush1.msra.mxu0 0.0
    %1412 = vmatprep.subr.mxu0 0.0
    %1413 = vmatpush1.msra.mxu0 0.0
    %1414 = vmatprep.subr.mxu0 0.0
    %1415 = vmatpush1.msra.mxu0 0.0
    %1416 = vmatprep.subr.mxu0 0.0
    %1417 = vmatpush1.msra.mxu0 0.0
    %1418 = vmatprep.subr.mxu0 0.0
    %1419 = vmatpush1.msra.mxu0 0.0
    %1420 = vmatprep.subr.mxu0 0.0
    %1421 = vmatpush1.msra.mxu0 0.0
    %1422 = vmatprep.subr.mxu0 0.0
    %1423 = vmatpush1.msra.mxu0 0.0
    %1424 = vmatprep.subr.mxu0 0.0
    %1425 = vmatpush1.msra.mxu0 0.0
    %1426 = vmatprep.subr.mxu0 0.0
    %1427 = vmatpush1.msra.mxu0 0.0
    %1428 = vmatprep.subr.mxu0 0.0
    %1429 = vmatpush1.msra.mxu0 0.0
    %1430 = vmatprep.subr.mxu0 0.0
    %1431 = vmatpush1.msra.mxu0 0.0
    %1432 = vmatprep.subr.mxu0 0.0
    %1433 = vmatpush1.msra.mxu0 0.0
    %1434 = vmatprep.subr.mxu0 0.0
    %1435 = vmatpush1.msra.mxu0 0.0
    %1436 = vmatprep.subr.mxu0 0.0
    %1437 = vmatpush1.msra.mxu0 0.0
    %1438 = vmatprep.subr.mxu0 0.0
    %1439 = vmatpush1.msra.mxu0 0.0
    %1440 = vmatprep.subr.mxu0 0.0
    %1441 = vmatpush1.msra.mxu0 0.0
    %1442 = vmatprep.subr.mxu0 0.0
    %1443 = vmatpush1.msra.mxu0 0.0
    %1444 = vmatprep.mubr.f32.mxu0 0.0
    %1445 = vmatmul.mubr.f32.gmra.mrb[0].mxu0 %v1378
    %v1446 = vpop.f32.mrb[0].mxu0
    %v1447 = vadd.f32 0.0, %v1446
    %v1448 = vpop.f32.mrb[0].mxu0
    %1449 = vdwg.mxu0
    %1452 = vrot.lane.b32.xlu0 %v1368, 24
    %v1453 = vpop.permute.xlu0 %1452
    %1454 = vrot.lane.b32.xlu0 %v1447, 24
    %v1455 = vpop.permute.xlu0 %1454
    %vm1458 = vcmask 261312
    %1459 = vst.msk [vmem:[#allocation7] sm:$0xff] %vm1458, %v1453
    %1460 = vst.msk [vmem:[#allocation7 + $0x8] sm:$0xff] %vm1458, %v1455
    // Predicated region
    $region18: #{tpu_custom_call.1} parent=1 // pred_check
      _
    $region19: #{tpu_custom_call.1} parent=1 // pred_check_branch
      %1462 = sbr.rel (0) target = $region21
    $region20: #{tpu_custom_call.1} parent=1 // pred_region
      %s1464 = ssub.s32 256, 256
      %1465 = vsyncadd [#allocation4], %s1464
      %s1466 = sshll.u32 [#allocation7], 4
      %s1467 = int_to_ptr.vmem [resolvable:$true] %s1466
      %1472 = dma.vmem_to_hbm [thread:$0]  %s1467, 256, %s2, [#allocation4], 128, 128, 8
    $region21: #{tpu_custom_call.1} parent=1 // pred_fallthru
      _
    // Predicated region
    $region22: #{tpu_custom_call.1} parent=1 // pred_check
      _
    $region23: #{tpu_custom_call.1} parent=1 // pred_check_branch
      %1474 = sbr.rel (0) target = $region25
    $region24: #{tpu_custom_call.1} parent=1 // pred_region
      %1475 = dma.done [#allocation4], 256
    $region25: #{tpu_custom_call.1} parent=1 // pred_fallthru
      _
    %1476 = vsyncpa [#allocation3], 1
    %1477 = vsyncpa [#allocation6], 1
    %1478 = vsyncpa [#allocation4], 1

</llo_original>
